<compile_context>
chip_gen: v7x
topology: tpu7x:2x2x1
jax: 0.10.0
libtpu: 0.0.40
codegen_flags: <defaults>
</compile_context>

<pallas_src>
import functools

import jax
import jax.numpy as jnp
from jax import lax
from jax.experimental import pallas as pl
from jax.experimental.pallas import tpu as pltpu


# ----------------------------------------------------------------------------------
# Pallas kernel: per-image multibox-loss partials (block of `bb` images per grid step).
# ----------------------------------------------------------------------------------
def _multibox_loss_kernel(conf_ref, labels_ref, fcp_ref, fct_ref, out_ref, *,
                          negpos_ratio):
    conf = conf_ref[...].astype(jnp.float32)            # (bb, C, P)
    labels = labels_ref[...][:, 0, :]                   # (bb, P) int32
    bb, C, P = conf.shape

    # --- per-prior cross entropy (lane-dense), per-prior max stabilization ----------
    row_max = jnp.max(conf, axis=1)                                          # (bb, P)
    lse = jnp.log(jnp.sum(jnp.exp(conf - row_max[:, None, :]), axis=1)) + row_max
    cls_iota = lax.broadcasted_iota(jnp.int32, (1, C, P), 1)                 # (1, C, P)
    gathered = jnp.sum(jnp.where(cls_iota == labels[:, None, :], conf, 0.0), axis=1)
    ce = lse - gathered                                                      # (bb, P) >= 0

    pos = labels > 0                                                         # (bb, P)
    posf = pos.astype(jnp.float32)
    num_pos = jnp.sum(pos.astype(jnp.int32), axis=1, keepdims=True)          # (bb, 1)
    num_neg = jnp.minimum(negpos_ratio * num_pos, P - 1)                     # (bb, 1)

    # --- hard negative mining: neg_i <=> loss_i >= num_neg-th largest mined loss ----
    # (bisection on the int32 bit pattern of the non-negative f32 mined losses)
    loss_mine = jnp.where(pos, 0.0, ce)                                      # (bb, P)
    loss_bits = pltpu.bitcast(loss_mine, jnp.int32)                          # (bb, P)

    def bisect(_, carry):
        lo, hi = carry                                                       # (bb, 1)
        mid = lo + ((hi - lo + 1) >> 1)
        cnt = jnp.sum((loss_bits >= mid).astype(jnp.int32), axis=1, keepdims=True)
        ok = cnt >= num_neg
        return jnp.where(ok, mid, lo), jnp.where(ok, hi, mid - 1)

    lo0 = jnp.zeros((bb, 1), jnp.int32)
    hi0 = jnp.full((bb, 1), 0x7F7FFFFF, jnp.int32)      # max finite f32 bit pattern
    vk_bits, _ = lax.fori_loop(0, 32, bisect, (lo0, hi0), unroll=True)

    neg = (loss_bits >= vk_bits) & (num_neg > 0)                             # (bb, P)
    sel = (pos | neg).astype(jnp.float32)

    # Confidence loss: sum of CE over pos|neg priors (size_average=False).
    loss_c = jnp.sum(ce * sel, axis=1, keepdims=True)                        # (bb, 1)

    # Four-corner regression: smooth L1 over positive priors (size_average=False);
    # the pos mask is folded in with a single multiply on the (bb, 8, P) tensor.
    d = fcp_ref[...].astype(jnp.float32) - fct_ref[...].astype(jnp.float32)  # (bb, 8, P)
    ad = jnp.abs(d)
    sl1 = jnp.where(ad < 1.0, 0.5 * d * d, ad - 0.5) * posf[:, None, :]
    loss_fc = jnp.sum(jnp.sum(sl1, axis=2), axis=1, keepdims=True)           # (bb, 1)

    # --- pack per-image partials into one lane-dense 128-wide row -------------------
    lane = lax.broadcasted_iota(jnp.int32, (1, 1, 128), 2)
    out_ref[...] = (jnp.where(lane == 0, loss_c[:, :, None], 0.0)
                    + jnp.where(lane == 1, loss_fc[:, :, None], 0.0)
                    + jnp.where(lane == 2, num_pos.astype(jnp.float32)[:, :, None], 0.0))


# ----------------------------------------------------------------------------------
# Plain-JAX glue: GT -> prior matching (external helper in the original repo).
# ----------------------------------------------------------------------------------
def _point_form(priors):
    return jnp.concatenate([priors[:, :2] - priors[:, 2:] / 2.0,
                            priors[:, :2] + priors[:, 2:] / 2.0], axis=1)


def _jaccard(box_a, box_b):
    max_xy = jnp.minimum(box_a[:, None, 2:], box_b[None, :, 2:])
    min_xy = jnp.maximum(box_a[:, None, :2], box_b[None, :, :2])
    wh = jnp.clip(max_xy - min_xy, 0.0)
    inter = wh[..., 0] * wh[..., 1]
    area_a = ((box_a[:, 2] - box_a[:, 0]) * (box_a[:, 3] - box_a[:, 1]))[:, None]
    area_b = ((box_b[:, 2] - box_b[:, 0]) * (box_b[:, 3] - box_b[:, 1]))[None, :]
    return inter / (area_a + area_b - inter)


def _match_only_four_corners(threshold, truths, priors, variances, labels):
    """Returns conf (P,) int32 and four_corners (8, P) f32 — already kernel layout.

    TODO(synk): `match_only_four_corners` is external to the provided module; standard
    SSD bipartite matching + TextBoxes++-style quad-corner encoding is used here.
    """
    num_obj = truths.shape[0]
    overlaps = _jaccard(truths[:, :4], _point_form(priors))       # (O, P)
    best_prior_idx = jnp.argmax(overlaps, axis=1)                 # (O,)
    best_truth_overlap = jnp.max(overlaps, axis=0)                # (P,)
    best_truth_idx = jnp.argmax(overlaps, axis=0)                 # (P,)
    best_truth_overlap = best_truth_overlap.at[best_prior_idx].set(2.0)
    best_truth_idx = best_truth_idx.at[best_prior_idx].set(jnp.arange(num_obj))
    conf = labels[best_truth_idx] + 1.0
    conf = jnp.where(best_truth_overlap < threshold, 0.0, conf).astype(jnp.int32)
    # Build the quad-corner targets directly corner-major (8, P): no (P, 8) transpose.
    corner_coords = truths[:, 4:12].T                             # (8, O)
    corners = corner_coords[:, best_truth_idx]                    # (8, P)
    centers = jnp.tile(priors[:, :2].T, (4, 1))                   # (8, P): cx,cy repeated
    sizes = jnp.tile(priors[:, 2:].T, (4, 1))                     # (8, P): w, h repeated
    four_corners = ((corners - centers) / (variances[0] * sizes)).astype(jnp.float32)
    return conf, four_corners


# ----------------------------------------------------------------------------------
# Block-size / VMEM budgeting (generation-aware).
# ----------------------------------------------------------------------------------
def _device_info():
    kind = ""
    try:
        kind = jax.devices()[0].device_kind.lower()
    except Exception:
        pass
    dual_tc = ("v7" in kind) or ("tpu7" in kind)
    # Physical VMEM with headroom: 128 MiB on v5e/v6e, 64 MiB per TC on v7x.
    vmem_cap = (48 << 20) if dual_tc else (96 << 20)
    return dual_tc, vmem_cap


def _pick_block_b(B, C, P, io_bytes, dual_tc, vmem_cap):
    def step_bytes(bb):
        ins = bb * P * (C + 16) * io_bytes + bb * P * 4      # conf + fc_p/fc_t + labels
        outs = bb * 128 * 4
        tmps = bb * P * (3 * C + 3 * 8 + 16) * 4             # rough f32 temporaries
        return 2 * (ins + outs) + tmps                       # double-buffered I/O

    cands = [bb for bb in (8, 4, 2, 1) if bb <= B and B % bb == 0]
    fits = [bb for bb in cands if step_bytes(bb) <= vmem_cap] or [1]
    if dual_tc and B >= 2:
        # Keep >= 2 grid steps so the "parallel" batch axis shards across both TCs.
        two_step = [bb for bb in fits if (B // bb) >= 2]
        block_b = two_step[0] if two_step else fits[0]
    else:
        # Single TC: largest block that fits (fewer, larger grid steps / DMAs).
        block_b = fits[0]
    vmem_limit = int(min(vmem_cap, max(32 << 20, 2 * step_bytes(block_b))))
    return block_b, vmem_limit


# ----------------------------------------------------------------------------------
# Wrapper (forward pass of MultiBoxLoss_only_four_corners).
# ----------------------------------------------------------------------------------
def multibox_loss_only_four_corners(conf_data, priors, four_corners_data, targets, *,
                                    num_classes, overlap_thresh=0.5, negpos_ratio=3,
                                    variance=(0.1, 0.2), io_dtype=jnp.float32):
    B, P, C = conf_data.shape
    assert C == num_classes
    priors = priors[:P, :]

    def match_one(t):
        return _match_only_four_corners(overlap_thresh, t[:, :-1], priors, variance,
                                        t[:, -1])

    # conf_t: (B, P) int32; four_corners_t: (B, 8, P) f32 (already kernel layout —
    # no extra wrapper-side transpose / HBM pass for this tensor).
    conf_t, four_corners_t = jax.vmap(match_one)(targets)

    # Lane-dense layouts for the kernel: priors on the 128-wide lane axis.
    # TODO(synk): conf_data / four_corners_data arrive as (B,P,C)/(B,P,8) per the module
    # interface, so one transpose each is unavoidable here; emitting them prior-minor
    # from the detection head would remove it entirely.
    conf_k = jnp.transpose(conf_data, (0, 2, 1)).astype(io_dtype)            # (B, C, P)
    labels_k = conf_t[:, None, :].astype(jnp.int32)                          # (B, 1, P)
    fcp_k = jnp.transpose(four_corners_data, (0, 2, 1)).astype(io_dtype)     # (B, 8, P)
    fct_k = four_corners_t.astype(io_dtype)                                  # (B, 8, P)

    dual_tc, vmem_cap = _device_info()
    io_bytes = jnp.dtype(io_dtype).itemsize
    block_b, vmem_limit = _pick_block_b(B, C, P, io_bytes, dual_tc, vmem_cap)
    grid = (B // block_b,)

    kernel = functools.partial(_multibox_loss_kernel, negpos_ratio=negpos_ratio)

    partials = pl.pallas_call(
        kernel,
        grid=grid,
        in_specs=[
            pl.BlockSpec((block_b, C, P), lambda g: (g, 0, 0)),
            pl.BlockSpec((block_b, 1, P), lambda g: (g, 0, 0)),
            pl.BlockSpec((block_b, 8, P), lambda g: (g, 0, 0)),
            pl.BlockSpec((block_b, 8, P), lambda g: (g, 0, 0)),
        ],
        out_specs=pl.BlockSpec((block_b, 1, 128), lambda g: (g, 0, 0)),
        out_shape=jax.ShapeDtypeStruct((B, 1, 128), jnp.float32),
        compiler_params=pltpu.CompilerParams(
            dimension_semantics=("parallel",),
            vmem_limit_bytes=vmem_limit),
    )(conf_k, labels_k, fcp_k, fct_k)

    loss_c_sum = jnp.sum(partials[:, 0, 0])
    loss_fc_sum = jnp.sum(partials[:, 0, 1])
    N = jnp.sum(partials[:, 0, 2])
    # TODO(synk): the PyTorch module returns float64 and divides by N even if N == 0;
    # identical semantics are kept here in float32 (TPU has no f64).
    loss_c = loss_c_sum / N
    loss_four_corners = loss_fc_sum / N
    return loss_c, loss_four_corners


if __name__ == "__main__":
    B, P, C, O = 2, 256, 4, 3   # batch, num_priors, num_classes, num_objs per image

    key = jax.random.PRNGKey(0)
    k1, k2, k3, k4, k5 = jax.random.split(key, 5)

    conf_data = jax.random.normal(k1, (B, P, C), dtype=jnp.float32)
    four_corners_data = jax.random.normal(k2, (B, P, 8), dtype=jnp.float32)

    # Prior boxes (cx, cy, w, h) on a 16x16 grid.
    g = (jnp.arange(16, dtype=jnp.float32) + 0.5) / 16.0
    cx, cy = jnp.meshgrid(g, g)
    priors = jnp.stack([cx.ravel(), cy.ravel(),
                        jnp.full((P,), 0.15, jnp.float32),
                        jnp.full((P,), 0.15, jnp.float32)], axis=1)

    # Ground-truth targets: [bbox(4), quad corners(8), label(1)] per object.
    centers = jax.random.uniform(k3, (B, O, 2), minval=0.25, maxval=0.75, dtype=jnp.float32)
    halfs = jax.random.uniform(k4, (B, O, 2), minval=0.05, maxval=0.15, dtype=jnp.float32)
    bbox = jnp.concatenate([centers - halfs, centers + halfs], axis=-1)      # (B,O,4)
    x1, y1, x2, y2 = bbox[..., 0], bbox[..., 1], bbox[..., 2], bbox[..., 3]
    quad = jnp.stack([x1, y1, x2, y1, x2, y2, x1, y2], axis=-1)              # (B,O,8)
    labels = jax.random.randint(k5, (B, O, 1), 0, C - 1).astype(jnp.float32)
    targets = jnp.concatenate([bbox, quad, labels], axis=-1)                 # (B,O,13)

    loss_c, loss_four_corners = multibox_loss_only_four_corners(
        conf_data, priors, four_corners_data, targets,
        num_classes=C, overlap_thresh=0.5, negpos_ratio=3, variance=(0.1, 0.2))
    jax.block_until_ready((loss_c, loss_four_corners))
    print("loss_c =", float(loss_c), " loss_four_corners =", float(loss_four_corners))
    print("KERNEL_OK")
</pallas_src>

<mosaic_0001>
module attributes {stable_mosaic.version = 11 : i64} {
  func.func @_multibox_loss_kernel(%arg0: i32, %arg1: memref<2x4x256xf32, #tpu.memory_space<vmem>>, %arg2: memref<2x1x256xi32, #tpu.memory_space<vmem>>, %arg3: memref<2x8x256xf32, #tpu.memory_space<vmem>>, %arg4: memref<2x8x256xf32, #tpu.memory_space<vmem>>, %arg5: memref<2x1x128xf32, #tpu.memory_space<vmem>>) attributes {dimension_semantics = [#tpu.dimension_semantics<parallel>], iteration_bounds = array<i64: 1>, scalar_prefetch = 0 : i64, scratch_operands = 0 : i64, tpu.core_type = #tpu.core_type<tc>, window_params = [{transform_indices = @transform_0, window_bounds = array<i64: 2, 4, 256>}, {transform_indices = @transform_1, window_bounds = array<i64: 2, 1, 256>}, {transform_indices = @transform_2, window_bounds = array<i64: 2, 8, 256>}, {transform_indices = @transform_3, window_bounds = array<i64: 2, 8, 256>}, {transform_indices = @transform_4, window_bounds = array<i64: 2, 1, 128>}]} {
    %c0 = arith.constant 0 : index
    %c0_0 = arith.constant 0 : index
    %c0_1 = arith.constant 0 : index
    %0 = vector.load %arg1[%c0, %c0_0, %c0_1] : memref<2x4x256xf32, #tpu.memory_space<vmem>>, vector<2x4x256xf32>
    %c0_2 = arith.constant 0 : index
    %c0_3 = arith.constant 0 : index
    %c0_4 = arith.constant 0 : index
    %1 = vector.load %arg2[%c0_2, %c0_3, %c0_4] : memref<2x1x256xi32, #tpu.memory_space<vmem>>, vector<2x1x256xi32>
    %2 = vector.shape_cast %1 : vector<2x1x256xi32> to vector<2x256xi32>
    %cst = arith.constant dense<0xFF800000> : vector<2x256xf32>
    %3 = vector.multi_reduction <maximumf>, %0, %cst [1] : vector<2x4x256xf32> to vector<2x256xf32>
    %4 = vector.shape_cast %3 : vector<2x256xf32> to vector<2x1x256xf32>
    %5 = vector.broadcast %4 : vector<2x1x256xf32> to vector<2x4x256xf32>
    %6 = arith.subf %0, %5 : vector<2x4x256xf32>
    %7 = math.exp %6 : vector<2x4x256xf32>
    %cst_5 = arith.constant dense<0.000000e+00> : vector<2x256xf32>
    %8 = vector.multi_reduction <add>, %7, %cst_5 [1] : vector<2x4x256xf32> to vector<2x256xf32>
    %9 = math.log %8 : vector<2x256xf32>
    %10 = arith.addf %9, %3 : vector<2x256xf32>
    %11 = tpu.iota {dimensions = array<i32: 1>} : vector<1x4x256xi32>
    %12 = vector.shape_cast %2 : vector<2x256xi32> to vector<2x1x256xi32>
    %13 = vector.broadcast %11 : vector<1x4x256xi32> to vector<2x4x256xi32>
    %14 = vector.broadcast %12 : vector<2x1x256xi32> to vector<2x4x256xi32>
    %15 = arith.cmpi eq, %13, %14 : vector<2x4x256xi32>
    %cst_6 = arith.constant 0.000000e+00 : f32
    %16 = vector.broadcast %cst_6 : f32 to vector<2x4x256xf32>
    %17 = arith.select %15, %0, %16 : vector<2x4x256xi1>, vector<2x4x256xf32>
    %cst_7 = arith.constant dense<0.000000e+00> : vector<2x256xf32>
    %18 = vector.multi_reduction <add>, %17, %cst_7 [1] : vector<2x4x256xf32> to vector<2x256xf32>
    %19 = arith.subf %10, %18 : vector<2x256xf32>
    %c0_i32 = arith.constant 0 : i32
    %20 = vector.broadcast %c0_i32 : i32 to vector<2x256xi32>
    %21 = arith.cmpi sgt, %2, %20 : vector<2x256xi32>
    %22 = arith.extui %21 : vector<2x256xi1> to vector<2x256xi32>
    %23 = arith.sitofp %22 : vector<2x256xi32> to vector<2x256xf32>
    %24 = arith.extui %21 : vector<2x256xi1> to vector<2x256xi32>
    %cst_8 = arith.constant dense<0> : vector<2xi32>
    %25 = vector.multi_reduction <add>, %24, %cst_8 [1] : vector<2x256xi32> to vector<2xi32>
    %26 = vector.shape_cast %25 : vector<2xi32> to vector<2x1xi32>
    %c3_i32 = arith.constant 3 : i32
    %27 = vector.broadcast %c3_i32 : i32 to vector<2x1xi32>
    %28 = arith.muli %27, %26 : vector<2x1xi32>
    %c255_i32 = arith.constant 255 : i32
    %29 = vector.broadcast %c255_i32 : i32 to vector<2x1xi32>
    %30 = arith.minsi %28, %29 : vector<2x1xi32>
    %cst_9 = arith.constant 0.000000e+00 : f32
    %31 = vector.broadcast %cst_9 : f32 to vector<2x256xf32>
    %32 = arith.select %21, %31, %19 : vector<2x256xi1>, vector<2x256xf32>
    %33 = tpu.bitcast %32 : vector<2x256xf32> -> vector<2x256xi32>
    %c0_i32_10 = arith.constant 0 : i32
    %34 = vector.broadcast %c0_i32_10 : i32 to vector<2x1xi32>
    %c2139095039_i32 = arith.constant 2139095039 : i32
    %35 = vector.broadcast %c2139095039_i32 : i32 to vector<2x1xi32>
    %c0_i32_11 = arith.constant 0 : i32
    %36 = arith.subi %35, %34 : vector<2x1xi32>
    %c1_i32 = arith.constant 1 : i32
    %37 = vector.broadcast %c1_i32 : i32 to vector<2x1xi32>
    %38 = arith.addi %36, %37 : vector<2x1xi32>
    %c1_i32_12 = arith.constant 1 : i32
    %39 = vector.broadcast %c1_i32_12 : i32 to vector<2x1xi32>
    %40 = arith.shrsi %38, %39 : vector<2x1xi32>
    %41 = arith.addi %34, %40 : vector<2x1xi32>
    %42 = vector.broadcast %41 : vector<2x1xi32> to vector<2x256xi32>
    %43 = arith.cmpi sge, %33, %42 : vector<2x256xi32>
    %44 = arith.extui %43 : vector<2x256xi1> to vector<2x256xi32>
    %cst_13 = arith.constant dense<0> : vector<2xi32>
    %45 = vector.multi_reduction <add>, %44, %cst_13 [1] : vector<2x256xi32> to vector<2xi32>
    %46 = vector.shape_cast %45 : vector<2xi32> to vector<2x1xi32>
    %47 = arith.cmpi sge, %46, %30 : vector<2x1xi32>
    %48 = arith.select %47, %41, %34 : vector<2x1xi1>, vector<2x1xi32>
    %c1_i32_14 = arith.constant 1 : i32
    %49 = vector.broadcast %c1_i32_14 : i32 to vector<2x1xi32>
    %50 = arith.subi %41, %49 : vector<2x1xi32>
    %51 = arith.select %47, %35, %50 : vector<2x1xi1>, vector<2x1xi32>
    %c1_i32_15 = arith.constant 1 : i32
    %52 = arith.subi %51, %48 : vector<2x1xi32>
    %c1_i32_16 = arith.constant 1 : i32
    %53 = vector.broadcast %c1_i32_16 : i32 to vector<2x1xi32>
    %54 = arith.addi %52, %53 : vector<2x1xi32>
    %c1_i32_17 = arith.constant 1 : i32
    %55 = vector.broadcast %c1_i32_17 : i32 to vector<2x1xi32>
    %56 = arith.shrsi %54, %55 : vector<2x1xi32>
    %57 = arith.addi %48, %56 : vector<2x1xi32>
    %58 = vector.broadcast %57 : vector<2x1xi32> to vector<2x256xi32>
    %59 = arith.cmpi sge, %33, %58 : vector<2x256xi32>
    %60 = arith.extui %59 : vector<2x256xi1> to vector<2x256xi32>
    %cst_18 = arith.constant dense<0> : vector<2xi32>
    %61 = vector.multi_reduction <add>, %60, %cst_18 [1] : vector<2x256xi32> to vector<2xi32>
    %62 = vector.shape_cast %61 : vector<2xi32> to vector<2x1xi32>
    %63 = arith.cmpi sge, %62, %30 : vector<2x1xi32>
    %64 = arith.select %63, %57, %48 : vector<2x1xi1>, vector<2x1xi32>
    %c1_i32_19 = arith.constant 1 : i32
    %65 = vector.broadcast %c1_i32_19 : i32 to vector<2x1xi32>
    %66 = arith.subi %57, %65 : vector<2x1xi32>
    %67 = arith.select %63, %51, %66 : vector<2x1xi1>, vector<2x1xi32>
    %c2_i32 = arith.constant 2 : i32
    %68 = arith.subi %67, %64 : vector<2x1xi32>
    %c1_i32_20 = arith.constant 1 : i32
    %69 = vector.broadcast %c1_i32_20 : i32 to vector<2x1xi32>
    %70 = arith.addi %68, %69 : vector<2x1xi32>
    %c1_i32_21 = arith.constant 1 : i32
    %71 = vector.broadcast %c1_i32_21 : i32 to vector<2x1xi32>
    %72 = arith.shrsi %70, %71 : vector<2x1xi32>
    %73 = arith.addi %64, %72 : vector<2x1xi32>
    %74 = vector.broadcast %73 : vector<2x1xi32> to vector<2x256xi32>
    %75 = arith.cmpi sge, %33, %74 : vector<2x256xi32>
    %76 = arith.extui %75 : vector<2x256xi1> to vector<2x256xi32>
    %cst_22 = arith.constant dense<0> : vector<2xi32>
    %77 = vector.multi_reduction <add>, %76, %cst_22 [1] : vector<2x256xi32> to vector<2xi32>
    %78 = vector.shape_cast %77 : vector<2xi32> to vector<2x1xi32>
    %79 = arith.cmpi sge, %78, %30 : vector<2x1xi32>
    %80 = arith.select %79, %73, %64 : vector<2x1xi1>, vector<2x1xi32>
    %c1_i32_23 = arith.constant 1 : i32
    %81 = vector.broadcast %c1_i32_23 : i32 to vector<2x1xi32>
    %82 = arith.subi %73, %81 : vector<2x1xi32>
    %83 = arith.select %79, %67, %82 : vector<2x1xi1>, vector<2x1xi32>
    %c3_i32_24 = arith.constant 3 : i32
    %84 = arith.subi %83, %80 : vector<2x1xi32>
    %c1_i32_25 = arith.constant 1 : i32
    %85 = vector.broadcast %c1_i32_25 : i32 to vector<2x1xi32>
    %86 = arith.addi %84, %85 : vector<2x1xi32>
    %c1_i32_26 = arith.constant 1 : i32
    %87 = vector.broadcast %c1_i32_26 : i32 to vector<2x1xi32>
    %88 = arith.shrsi %86, %87 : vector<2x1xi32>
    %89 = arith.addi %80, %88 : vector<2x1xi32>
    %90 = vector.broadcast %89 : vector<2x1xi32> to vector<2x256xi32>
    %91 = arith.cmpi sge, %33, %90 : vector<2x256xi32>
    %92 = arith.extui %91 : vector<2x256xi1> to vector<2x256xi32>
    %cst_27 = arith.constant dense<0> : vector<2xi32>
    %93 = vector.multi_reduction <add>, %92, %cst_27 [1] : vector<2x256xi32> to vector<2xi32>
    %94 = vector.shape_cast %93 : vector<2xi32> to vector<2x1xi32>
    %95 = arith.cmpi sge, %94, %30 : vector<2x1xi32>
    %96 = arith.select %95, %89, %80 : vector<2x1xi1>, vector<2x1xi32>
    %c1_i32_28 = arith.constant 1 : i32
    %97 = vector.broadcast %c1_i32_28 : i32 to vector<2x1xi32>
    %98 = arith.subi %89, %97 : vector<2x1xi32>
    %99 = arith.select %95, %83, %98 : vector<2x1xi1>, vector<2x1xi32>
    %c4_i32 = arith.constant 4 : i32
    %100 = arith.subi %99, %96 : vector<2x1xi32>
    %c1_i32_29 = arith.constant 1 : i32
    %101 = vector.broadcast %c1_i32_29 : i32 to vector<2x1xi32>
    %102 = arith.addi %100, %101 : vector<2x1xi32>
    %c1_i32_30 = arith.constant 1 : i32
    %103 = vector.broadcast %c1_i32_30 : i32 to vector<2x1xi32>
    %104 = arith.shrsi %102, %103 : vector<2x1xi32>
    %105 = arith.addi %96, %104 : vector<2x1xi32>
    %106 = vector.broadcast %105 : vector<2x1xi32> to vector<2x256xi32>
    %107 = arith.cmpi sge, %33, %106 : vector<2x256xi32>
    %108 = arith.extui %107 : vector<2x256xi1> to vector<2x256xi32>
    %cst_31 = arith.constant dense<0> : vector<2xi32>
    %109 = vector.multi_reduction <add>, %108, %cst_31 [1] : vector<2x256xi32> to vector<2xi32>
    %110 = vector.shape_cast %109 : vector<2xi32> to vector<2x1xi32>
    %111 = arith.cmpi sge, %110, %30 : vector<2x1xi32>
    %112 = arith.select %111, %105, %96 : vector<2x1xi1>, vector<2x1xi32>
    %c1_i32_32 = arith.constant 1 : i32
    %113 = vector.broadcast %c1_i32_32 : i32 to vector<2x1xi32>
    %114 = arith.subi %105, %113 : vector<2x1xi32>
    %115 = arith.select %111, %99, %114 : vector<2x1xi1>, vector<2x1xi32>
    %c5_i32 = arith.constant 5 : i32
    %116 = arith.subi %115, %112 : vector<2x1xi32>
    %c1_i32_33 = arith.constant 1 : i32
    %117 = vector.broadcast %c1_i32_33 : i32 to vector<2x1xi32>
    %118 = arith.addi %116, %117 : vector<2x1xi32>
    %c1_i32_34 = arith.constant 1 : i32
    %119 = vector.broadcast %c1_i32_34 : i32 to vector<2x1xi32>
    %120 = arith.shrsi %118, %119 : vector<2x1xi32>
    %121 = arith.addi %112, %120 : vector<2x1xi32>
    %122 = vector.broadcast %121 : vector<2x1xi32> to vector<2x256xi32>
    %123 = arith.cmpi sge, %33, %122 : vector<2x256xi32>
    %124 = arith.extui %123 : vector<2x256xi1> to vector<2x256xi32>
    %cst_35 = arith.constant dense<0> : vector<2xi32>
    %125 = vector.multi_reduction <add>, %124, %cst_35 [1] : vector<2x256xi32> to vector<2xi32>
    %126 = vector.shape_cast %125 : vector<2xi32> to vector<2x1xi32>
    %127 = arith.cmpi sge, %126, %30 : vector<2x1xi32>
    %128 = arith.select %127, %121, %112 : vector<2x1xi1>, vector<2x1xi32>
    %c1_i32_36 = arith.constant 1 : i32
    %129 = vector.broadcast %c1_i32_36 : i32 to vector<2x1xi32>
    %130 = arith.subi %121, %129 : vector<2x1xi32>
    %131 = arith.select %127, %115, %130 : vector<2x1xi1>, vector<2x1xi32>
    %c6_i32 = arith.constant 6 : i32
    %132 = arith.subi %131, %128 : vector<2x1xi32>
    %c1_i32_37 = arith.constant 1 : i32
    %133 = vector.broadcast %c1_i32_37 : i32 to vector<2x1xi32>
    %134 = arith.addi %132, %133 : vector<2x1xi32>
    %c1_i32_38 = arith.constant 1 : i32
    %135 = vector.broadcast %c1_i32_38 : i32 to vector<2x1xi32>
    %136 = arith.shrsi %134, %135 : vector<2x1xi32>
    %137 = arith.addi %128, %136 : vector<2x1xi32>
    %138 = vector.broadcast %137 : vector<2x1xi32> to vector<2x256xi32>
    %139 = arith.cmpi sge, %33, %138 : vector<2x256xi32>
    %140 = arith.extui %139 : vector<2x256xi1> to vector<2x256xi32>
    %cst_39 = arith.constant dense<0> : vector<2xi32>
    %141 = vector.multi_reduction <add>, %140, %cst_39 [1] : vector<2x256xi32> to vector<2xi32>
    %142 = vector.shape_cast %141 : vector<2xi32> to vector<2x1xi32>
    %143 = arith.cmpi sge, %142, %30 : vector<2x1xi32>
    %144 = arith.select %143, %137, %128 : vector<2x1xi1>, vector<2x1xi32>
    %c1_i32_40 = arith.constant 1 : i32
    %145 = vector.broadcast %c1_i32_40 : i32 to vector<2x1xi32>
    %146 = arith.subi %137, %145 : vector<2x1xi32>
    %147 = arith.select %143, %131, %146 : vector<2x1xi1>, vector<2x1xi32>
    %c7_i32 = arith.constant 7 : i32
    %148 = arith.subi %147, %144 : vector<2x1xi32>
    %c1_i32_41 = arith.constant 1 : i32
    %149 = vector.broadcast %c1_i32_41 : i32 to vector<2x1xi32>
    %150 = arith.addi %148, %149 : vector<2x1xi32>
    %c1_i32_42 = arith.constant 1 : i32
    %151 = vector.broadcast %c1_i32_42 : i32 to vector<2x1xi32>
    %152 = arith.shrsi %150, %151 : vector<2x1xi32>
    %153 = arith.addi %144, %152 : vector<2x1xi32>
    %154 = vector.broadcast %153 : vector<2x1xi32> to vector<2x256xi32>
    %155 = arith.cmpi sge, %33, %154 : vector<2x256xi32>
    %156 = arith.extui %155 : vector<2x256xi1> to vector<2x256xi32>
    %cst_43 = arith.constant dense<0> : vector<2xi32>
    %157 = vector.multi_reduction <add>, %156, %cst_43 [1] : vector<2x256xi32> to vector<2xi32>
    %158 = vector.shape_cast %157 : vector<2xi32> to vector<2x1xi32>
    %159 = arith.cmpi sge, %158, %30 : vector<2x1xi32>
    %160 = arith.select %159, %153, %144 : vector<2x1xi1>, vector<2x1xi32>
    %c1_i32_44 = arith.constant 1 : i32
    %161 = vector.broadcast %c1_i32_44 : i32 to vector<2x1xi32>
    %162 = arith.subi %153, %161 : vector<2x1xi32>
    %163 = arith.select %159, %147, %162 : vector<2x1xi1>, vector<2x1xi32>
    %c8_i32 = arith.constant 8 : i32
    %164 = arith.subi %163, %160 : vector<2x1xi32>
    %c1_i32_45 = arith.constant 1 : i32
    %165 = vector.broadcast %c1_i32_45 : i32 to vector<2x1xi32>
    %166 = arith.addi %164, %165 : vector<2x1xi32>
    %c1_i32_46 = arith.constant 1 : i32
    %167 = vector.broadcast %c1_i32_46 : i32 to vector<2x1xi32>
    %168 = arith.shrsi %166, %167 : vector<2x1xi32>
    %169 = arith.addi %160, %168 : vector<2x1xi32>
    %170 = vector.broadcast %169 : vector<2x1xi32> to vector<2x256xi32>
    %171 = arith.cmpi sge, %33, %170 : vector<2x256xi32>
    %172 = arith.extui %171 : vector<2x256xi1> to vector<2x256xi32>
    %cst_47 = arith.constant dense<0> : vector<2xi32>
    %173 = vector.multi_reduction <add>, %172, %cst_47 [1] : vector<2x256xi32> to vector<2xi32>
    %174 = vector.shape_cast %173 : vector<2xi32> to vector<2x1xi32>
    %175 = arith.cmpi sge, %174, %30 : vector<2x1xi32>
    %176 = arith.select %175, %169, %160 : vector<2x1xi1>, vector<2x1xi32>
    %c1_i32_48 = arith.constant 1 : i32
    %177 = vector.broadcast %c1_i32_48 : i32 to vector<2x1xi32>
    %178 = arith.subi %169, %177 : vector<2x1xi32>
    %179 = arith.select %175, %163, %178 : vector<2x1xi1>, vector<2x1xi32>
    %c9_i32 = arith.constant 9 : i32
    %180 = arith.subi %179, %176 : vector<2x1xi32>
    %c1_i32_49 = arith.constant 1 : i32
    %181 = vector.broadcast %c1_i32_49 : i32 to vector<2x1xi32>
    %182 = arith.addi %180, %181 : vector<2x1xi32>
    %c1_i32_50 = arith.constant 1 : i32
    %183 = vector.broadcast %c1_i32_50 : i32 to vector<2x1xi32>
    %184 = arith.shrsi %182, %183 : vector<2x1xi32>
    %185 = arith.addi %176, %184 : vector<2x1xi32>
    %186 = vector.broadcast %185 : vector<2x1xi32> to vector<2x256xi32>
    %187 = arith.cmpi sge, %33, %186 : vector<2x256xi32>
    %188 = arith.extui %187 : vector<2x256xi1> to vector<2x256xi32>
    %cst_51 = arith.constant dense<0> : vector<2xi32>
    %189 = vector.multi_reduction <add>, %188, %cst_51 [1] : vector<2x256xi32> to vector<2xi32>
    %190 = vector.shape_cast %189 : vector<2xi32> to vector<2x1xi32>
    %191 = arith.cmpi sge, %190, %30 : vector<2x1xi32>
    %192 = arith.select %191, %185, %176 : vector<2x1xi1>, vector<2x1xi32>
    %c1_i32_52 = arith.constant 1 : i32
    %193 = vector.broadcast %c1_i32_52 : i32 to vector<2x1xi32>
    %194 = arith.subi %185, %193 : vector<2x1xi32>
    %195 = arith.select %191, %179, %194 : vector<2x1xi1>, vector<2x1xi32>
    %c10_i32 = arith.constant 10 : i32
    %196 = arith.subi %195, %192 : vector<2x1xi32>
    %c1_i32_53 = arith.constant 1 : i32
    %197 = vector.broadcast %c1_i32_53 : i32 to vector<2x1xi32>
    %198 = arith.addi %196, %197 : vector<2x1xi32>
    %c1_i32_54 = arith.constant 1 : i32
    %199 = vector.broadcast %c1_i32_54 : i32 to vector<2x1xi32>
    %200 = arith.shrsi %198, %199 : vector<2x1xi32>
    %201 = arith.addi %192, %200 : vector<2x1xi32>
    %202 = vector.broadcast %201 : vector<2x1xi32> to vector<2x256xi32>
    %203 = arith.cmpi sge, %33, %202 : vector<2x256xi32>
    %204 = arith.extui %203 : vector<2x256xi1> to vector<2x256xi32>
    %cst_55 = arith.constant dense<0> : vector<2xi32>
    %205 = vector.multi_reduction <add>, %204, %cst_55 [1] : vector<2x256xi32> to vector<2xi32>
    %206 = vector.shape_cast %205 : vector<2xi32> to vector<2x1xi32>
    %207 = arith.cmpi sge, %206, %30 : vector<2x1xi32>
    %208 = arith.select %207, %201, %192 : vector<2x1xi1>, vector<2x1xi32>
    %c1_i32_56 = arith.constant 1 : i32
    %209 = vector.broadcast %c1_i32_56 : i32 to vector<2x1xi32>
    %210 = arith.subi %201, %209 : vector<2x1xi32>
    %211 = arith.select %207, %195, %210 : vector<2x1xi1>, vector<2x1xi32>
    %c11_i32 = arith.constant 11 : i32
    %212 = arith.subi %211, %208 : vector<2x1xi32>
    %c1_i32_57 = arith.constant 1 : i32
    %213 = vector.broadcast %c1_i32_57 : i32 to vector<2x1xi32>
    %214 = arith.addi %212, %213 : vector<2x1xi32>
    %c1_i32_58 = arith.constant 1 : i32
    %215 = vector.broadcast %c1_i32_58 : i32 to vector<2x1xi32>
    %216 = arith.shrsi %214, %215 : vector<2x1xi32>
    %217 = arith.addi %208, %216 : vector<2x1xi32>
    %218 = vector.broadcast %217 : vector<2x1xi32> to vector<2x256xi32>
    %219 = arith.cmpi sge, %33, %218 : vector<2x256xi32>
    %220 = arith.extui %219 : vector<2x256xi1> to vector<2x256xi32>
    %cst_59 = arith.constant dense<0> : vector<2xi32>
    %221 = vector.multi_reduction <add>, %220, %cst_59 [1] : vector<2x256xi32> to vector<2xi32>
    %222 = vector.shape_cast %221 : vector<2xi32> to vector<2x1xi32>
    %223 = arith.cmpi sge, %222, %30 : vector<2x1xi32>
    %224 = arith.select %223, %217, %208 : vector<2x1xi1>, vector<2x1xi32>
    %c1_i32_60 = arith.constant 1 : i32
    %225 = vector.broadcast %c1_i32_60 : i32 to vector<2x1xi32>
    %226 = arith.subi %217, %225 : vector<2x1xi32>
    %227 = arith.select %223, %211, %226 : vector<2x1xi1>, vector<2x1xi32>
    %c12_i32 = arith.constant 12 : i32
    %228 = arith.subi %227, %224 : vector<2x1xi32>
    %c1_i32_61 = arith.constant 1 : i32
    %229 = vector.broadcast %c1_i32_61 : i32 to vector<2x1xi32>
    %230 = arith.addi %228, %229 : vector<2x1xi32>
    %c1_i32_62 = arith.constant 1 : i32
    %231 = vector.broadcast %c1_i32_62 : i32 to vector<2x1xi32>
    %232 = arith.shrsi %230, %231 : vector<2x1xi32>
    %233 = arith.addi %224, %232 : vector<2x1xi32>
    %234 = vector.broadcast %233 : vector<2x1xi32> to vector<2x256xi32>
    %235 = arith.cmpi sge, %33, %234 : vector<2x256xi32>
    %236 = arith.extui %235 : vector<2x256xi1> to vector<2x256xi32>
    %cst_63 = arith.constant dense<0> : vector<2xi32>
    %237 = vector.multi_reduction <add>, %236, %cst_63 [1] : vector<2x256xi32> to vector<2xi32>
    %238 = vector.shape_cast %237 : vector<2xi32> to vector<2x1xi32>
    %239 = arith.cmpi sge, %238, %30 : vector<2x1xi32>
    %240 = arith.select %239, %233, %224 : vector<2x1xi1>, vector<2x1xi32>
    %c1_i32_64 = arith.constant 1 : i32
    %241 = vector.broadcast %c1_i32_64 : i32 to vector<2x1xi32>
    %242 = arith.subi %233, %241 : vector<2x1xi32>
    %243 = arith.select %239, %227, %242 : vector<2x1xi1>, vector<2x1xi32>
    %c13_i32 = arith.constant 13 : i32
    %244 = arith.subi %243, %240 : vector<2x1xi32>
    %c1_i32_65 = arith.constant 1 : i32
    %245 = vector.broadcast %c1_i32_65 : i32 to vector<2x1xi32>
    %246 = arith.addi %244, %245 : vector<2x1xi32>
    %c1_i32_66 = arith.constant 1 : i32
    %247 = vector.broadcast %c1_i32_66 : i32 to vector<2x1xi32>
    %248 = arith.shrsi %246, %247 : vector<2x1xi32>
    %249 = arith.addi %240, %248 : vector<2x1xi32>
    %250 = vector.broadcast %249 : vector<2x1xi32> to vector<2x256xi32>
    %251 = arith.cmpi sge, %33, %250 : vector<2x256xi32>
    %252 = arith.extui %251 : vector<2x256xi1> to vector<2x256xi32>
    %cst_67 = arith.constant dense<0> : vector<2xi32>
    %253 = vector.multi_reduction <add>, %252, %cst_67 [1] : vector<2x256xi32> to vector<2xi32>
    %254 = vector.shape_cast %253 : vector<2xi32> to vector<2x1xi32>
    %255 = arith.cmpi sge, %254, %30 : vector<2x1xi32>
    %256 = arith.select %255, %249, %240 : vector<2x1xi1>, vector<2x1xi32>
    %c1_i32_68 = arith.constant 1 : i32
    %257 = vector.broadcast %c1_i32_68 : i32 to vector<2x1xi32>
    %258 = arith.subi %249, %257 : vector<2x1xi32>
    %259 = arith.select %255, %243, %258 : vector<2x1xi1>, vector<2x1xi32>
    %c14_i32 = arith.constant 14 : i32
    %260 = arith.subi %259, %256 : vector<2x1xi32>
    %c1_i32_69 = arith.constant 1 : i32
    %261 = vector.broadcast %c1_i32_69 : i32 to vector<2x1xi32>
    %262 = arith.addi %260, %261 : vector<2x1xi32>
    %c1_i32_70 = arith.constant 1 : i32
    %263 = vector.broadcast %c1_i32_70 : i32 to vector<2x1xi32>
    %264 = arith.shrsi %262, %263 : vector<2x1xi32>
    %265 = arith.addi %256, %264 : vector<2x1xi32>
    %266 = vector.broadcast %265 : vector<2x1xi32> to vector<2x256xi32>
    %267 = arith.cmpi sge, %33, %266 : vector<2x256xi32>
    %268 = arith.extui %267 : vector<2x256xi1> to vector<2x256xi32>
    %cst_71 = arith.constant dense<0> : vector<2xi32>
    %269 = vector.multi_reduction <add>, %268, %cst_71 [1] : vector<2x256xi32> to vector<2xi32>
    %270 = vector.shape_cast %269 : vector<2xi32> to vector<2x1xi32>
    %271 = arith.cmpi sge, %270, %30 : vector<2x1xi32>
    %272 = arith.select %271, %265, %256 : vector<2x1xi1>, vector<2x1xi32>
    %c1_i32_72 = arith.constant 1 : i32
    %273 = vector.broadcast %c1_i32_72 : i32 to vector<2x1xi32>
    %274 = arith.subi %265, %273 : vector<2x1xi32>
    %275 = arith.select %271, %259, %274 : vector<2x1xi1>, vector<2x1xi32>
    %c15_i32 = arith.constant 15 : i32
    %276 = arith.subi %275, %272 : vector<2x1xi32>
    %c1_i32_73 = arith.constant 1 : i32
    %277 = vector.broadcast %c1_i32_73 : i32 to vector<2x1xi32>
    %278 = arith.addi %276, %277 : vector<2x1xi32>
    %c1_i32_74 = arith.constant 1 : i32
    %279 = vector.broadcast %c1_i32_74 : i32 to vector<2x1xi32>
    %280 = arith.shrsi %278, %279 : vector<2x1xi32>
    %281 = arith.addi %272, %280 : vector<2x1xi32>
    %282 = vector.broadcast %281 : vector<2x1xi32> to vector<2x256xi32>
    %283 = arith.cmpi sge, %33, %282 : vector<2x256xi32>
    %284 = arith.extui %283 : vector<2x256xi1> to vector<2x256xi32>
    %cst_75 = arith.constant dense<0> : vector<2xi32>
    %285 = vector.multi_reduction <add>, %284, %cst_75 [1] : vector<2x256xi32> to vector<2xi32>
    %286 = vector.shape_cast %285 : vector<2xi32> to vector<2x1xi32>
    %287 = arith.cmpi sge, %286, %30 : vector<2x1xi32>
    %288 = arith.select %287, %281, %272 : vector<2x1xi1>, vector<2x1xi32>
    %c1_i32_76 = arith.constant 1 : i32
    %289 = vector.broadcast %c1_i32_76 : i32 to vector<2x1xi32>
    %290 = arith.subi %281, %289 : vector<2x1xi32>
    %291 = arith.select %287, %275, %290 : vector<2x1xi1>, vector<2x1xi32>
    %c16_i32 = arith.constant 16 : i32
    %292 = arith.subi %291, %288 : vector<2x1xi32>
    %c1_i32_77 = arith.constant 1 : i32
    %293 = vector.broadcast %c1_i32_77 : i32 to vector<2x1xi32>
    %294 = arith.addi %292, %293 : vector<2x1xi32>
    %c1_i32_78 = arith.constant 1 : i32
    %295 = vector.broadcast %c1_i32_78 : i32 to vector<2x1xi32>
    %296 = arith.shrsi %294, %295 : vector<2x1xi32>
    %297 = arith.addi %288, %296 : vector<2x1xi32>
    %298 = vector.broadcast %297 : vector<2x1xi32> to vector<2x256xi32>
    %299 = arith.cmpi sge, %33, %298 : vector<2x256xi32>
    %300 = arith.extui %299 : vector<2x256xi1> to vector<2x256xi32>
    %cst_79 = arith.constant dense<0> : vector<2xi32>
    %301 = vector.multi_reduction <add>, %300, %cst_79 [1] : vector<2x256xi32> to vector<2xi32>
    %302 = vector.shape_cast %301 : vector<2xi32> to vector<2x1xi32>
    %303 = arith.cmpi sge, %302, %30 : vector<2x1xi32>
    %304 = arith.select %303, %297, %288 : vector<2x1xi1>, vector<2x1xi32>
    %c1_i32_80 = arith.constant 1 : i32
    %305 = vector.broadcast %c1_i32_80 : i32 to vector<2x1xi32>
    %306 = arith.subi %297, %305 : vector<2x1xi32>
    %307 = arith.select %303, %291, %306 : vector<2x1xi1>, vector<2x1xi32>
    %c17_i32 = arith.constant 17 : i32
    %308 = arith.subi %307, %304 : vector<2x1xi32>
    %c1_i32_81 = arith.constant 1 : i32
    %309 = vector.broadcast %c1_i32_81 : i32 to vector<2x1xi32>
    %310 = arith.addi %308, %309 : vector<2x1xi32>
    %c1_i32_82 = arith.constant 1 : i32
    %311 = vector.broadcast %c1_i32_82 : i32 to vector<2x1xi32>
    %312 = arith.shrsi %310, %311 : vector<2x1xi32>
    %313 = arith.addi %304, %312 : vector<2x1xi32>
    %314 = vector.broadcast %313 : vector<2x1xi32> to vector<2x256xi32>
    %315 = arith.cmpi sge, %33, %314 : vector<2x256xi32>
    %316 = arith.extui %315 : vector<2x256xi1> to vector<2x256xi32>
    %cst_83 = arith.constant dense<0> : vector<2xi32>
    %317 = vector.multi_reduction <add>, %316, %cst_83 [1] : vector<2x256xi32> to vector<2xi32>
    %318 = vector.shape_cast %317 : vector<2xi32> to vector<2x1xi32>
    %319 = arith.cmpi sge, %318, %30 : vector<2x1xi32>
    %320 = arith.select %319, %313, %304 : vector<2x1xi1>, vector<2x1xi32>
    %c1_i32_84 = arith.constant 1 : i32
    %321 = vector.broadcast %c1_i32_84 : i32 to vector<2x1xi32>
    %322 = arith.subi %313, %321 : vector<2x1xi32>
    %323 = arith.select %319, %307, %322 : vector<2x1xi1>, vector<2x1xi32>
    %c18_i32 = arith.constant 18 : i32
    %324 = arith.subi %323, %320 : vector<2x1xi32>
    %c1_i32_85 = arith.constant 1 : i32
    %325 = vector.broadcast %c1_i32_85 : i32 to vector<2x1xi32>
    %326 = arith.addi %324, %325 : vector<2x1xi32>
    %c1_i32_86 = arith.constant 1 : i32
    %327 = vector.broadcast %c1_i32_86 : i32 to vector<2x1xi32>
    %328 = arith.shrsi %326, %327 : vector<2x1xi32>
    %329 = arith.addi %320, %328 : vector<2x1xi32>
    %330 = vector.broadcast %329 : vector<2x1xi32> to vector<2x256xi32>
    %331 = arith.cmpi sge, %33, %330 : vector<2x256xi32>
    %332 = arith.extui %331 : vector<2x256xi1> to vector<2x256xi32>
    %cst_87 = arith.constant dense<0> : vector<2xi32>
    %333 = vector.multi_reduction <add>, %332, %cst_87 [1] : vector<2x256xi32> to vector<2xi32>
    %334 = vector.shape_cast %333 : vector<2xi32> to vector<2x1xi32>
    %335 = arith.cmpi sge, %334, %30 : vector<2x1xi32>
    %336 = arith.select %335, %329, %320 : vector<2x1xi1>, vector<2x1xi32>
    %c1_i32_88 = arith.constant 1 : i32
    %337 = vector.broadcast %c1_i32_88 : i32 to vector<2x1xi32>
    %338 = arith.subi %329, %337 : vector<2x1xi32>
    %339 = arith.select %335, %323, %338 : vector<2x1xi1>, vector<2x1xi32>
    %c19_i32 = arith.constant 19 : i32
    %340 = arith.subi %339, %336 : vector<2x1xi32>
    %c1_i32_89 = arith.constant 1 : i32
    %341 = vector.broadcast %c1_i32_89 : i32 to vector<2x1xi32>
    %342 = arith.addi %340, %341 : vector<2x1xi32>
    %c1_i32_90 = arith.constant 1 : i32
    %343 = vector.broadcast %c1_i32_90 : i32 to vector<2x1xi32>
    %344 = arith.shrsi %342, %343 : vector<2x1xi32>
    %345 = arith.addi %336, %344 : vector<2x1xi32>
    %346 = vector.broadcast %345 : vector<2x1xi32> to vector<2x256xi32>
    %347 = arith.cmpi sge, %33, %346 : vector<2x256xi32>
    %348 = arith.extui %347 : vector<2x256xi1> to vector<2x256xi32>
    %cst_91 = arith.constant dense<0> : vector<2xi32>
    %349 = vector.multi_reduction <add>, %348, %cst_91 [1] : vector<2x256xi32> to vector<2xi32>
    %350 = vector.shape_cast %349 : vector<2xi32> to vector<2x1xi32>
    %351 = arith.cmpi sge, %350, %30 : vector<2x1xi32>
    %352 = arith.select %351, %345, %336 : vector<2x1xi1>, vector<2x1xi32>
    %c1_i32_92 = arith.constant 1 : i32
    %353 = vector.broadcast %c1_i32_92 : i32 to vector<2x1xi32>
    %354 = arith.subi %345, %353 : vector<2x1xi32>
    %355 = arith.select %351, %339, %354 : vector<2x1xi1>, vector<2x1xi32>
    %c20_i32 = arith.constant 20 : i32
    %356 = arith.subi %355, %352 : vector<2x1xi32>
    %c1_i32_93 = arith.constant 1 : i32
    %357 = vector.broadcast %c1_i32_93 : i32 to vector<2x1xi32>
    %358 = arith.addi %356, %357 : vector<2x1xi32>
    %c1_i32_94 = arith.constant 1 : i32
    %359 = vector.broadcast %c1_i32_94 : i32 to vector<2x1xi32>
    %360 = arith.shrsi %358, %359 : vector<2x1xi32>
    %361 = arith.addi %352, %360 : vector<2x1xi32>
    %362 = vector.broadcast %361 : vector<2x1xi32> to vector<2x256xi32>
    %363 = arith.cmpi sge, %33, %362 : vector<2x256xi32>
    %364 = arith.extui %363 : vector<2x256xi1> to vector<2x256xi32>
    %cst_95 = arith.constant dense<0> : vector<2xi32>
    %365 = vector.multi_reduction <add>, %364, %cst_95 [1] : vector<2x256xi32> to vector<2xi32>
    %366 = vector.shape_cast %365 : vector<2xi32> to vector<2x1xi32>
    %367 = arith.cmpi sge, %366, %30 : vector<2x1xi32>
    %368 = arith.select %367, %361, %352 : vector<2x1xi1>, vector<2x1xi32>
    %c1_i32_96 = arith.constant 1 : i32
    %369 = vector.broadcast %c1_i32_96 : i32 to vector<2x1xi32>
    %370 = arith.subi %361, %369 : vector<2x1xi32>
    %371 = arith.select %367, %355, %370 : vector<2x1xi1>, vector<2x1xi32>
    %c21_i32 = arith.constant 21 : i32
    %372 = arith.subi %371, %368 : vector<2x1xi32>
    %c1_i32_97 = arith.constant 1 : i32
    %373 = vector.broadcast %c1_i32_97 : i32 to vector<2x1xi32>
    %374 = arith.addi %372, %373 : vector<2x1xi32>
    %c1_i32_98 = arith.constant 1 : i32
    %375 = vector.broadcast %c1_i32_98 : i32 to vector<2x1xi32>
    %376 = arith.shrsi %374, %375 : vector<2x1xi32>
    %377 = arith.addi %368, %376 : vector<2x1xi32>
    %378 = vector.broadcast %377 : vector<2x1xi32> to vector<2x256xi32>
    %379 = arith.cmpi sge, %33, %378 : vector<2x256xi32>
    %380 = arith.extui %379 : vector<2x256xi1> to vector<2x256xi32>
    %cst_99 = arith.constant dense<0> : vector<2xi32>
    %381 = vector.multi_reduction <add>, %380, %cst_99 [1] : vector<2x256xi32> to vector<2xi32>
    %382 = vector.shape_cast %381 : vector<2xi32> to vector<2x1xi32>
    %383 = arith.cmpi sge, %382, %30 : vector<2x1xi32>
    %384 = arith.select %383, %377, %368 : vector<2x1xi1>, vector<2x1xi32>
    %c1_i32_100 = arith.constant 1 : i32
    %385 = vector.broadcast %c1_i32_100 : i32 to vector<2x1xi32>
    %386 = arith.subi %377, %385 : vector<2x1xi32>
    %387 = arith.select %383, %371, %386 : vector<2x1xi1>, vector<2x1xi32>
    %c22_i32 = arith.constant 22 : i32
    %388 = arith.subi %387, %384 : vector<2x1xi32>
    %c1_i32_101 = arith.constant 1 : i32
    %389 = vector.broadcast %c1_i32_101 : i32 to vector<2x1xi32>
    %390 = arith.addi %388, %389 : vector<2x1xi32>
    %c1_i32_102 = arith.constant 1 : i32
    %391 = vector.broadcast %c1_i32_102 : i32 to vector<2x1xi32>
    %392 = arith.shrsi %390, %391 : vector<2x1xi32>
    %393 = arith.addi %384, %392 : vector<2x1xi32>
    %394 = vector.broadcast %393 : vector<2x1xi32> to vector<2x256xi32>
    %395 = arith.cmpi sge, %33, %394 : vector<2x256xi32>
    %396 = arith.extui %395 : vector<2x256xi1> to vector<2x256xi32>
    %cst_103 = arith.constant dense<0> : vector<2xi32>
    %397 = vector.multi_reduction <add>, %396, %cst_103 [1] : vector<2x256xi32> to vector<2xi32>
    %398 = vector.shape_cast %397 : vector<2xi32> to vector<2x1xi32>
    %399 = arith.cmpi sge, %398, %30 : vector<2x1xi32>
    %400 = arith.select %399, %393, %384 : vector<2x1xi1>, vector<2x1xi32>
    %c1_i32_104 = arith.constant 1 : i32
    %401 = vector.broadcast %c1_i32_104 : i32 to vector<2x1xi32>
    %402 = arith.subi %393, %401 : vector<2x1xi32>
    %403 = arith.select %399, %387, %402 : vector<2x1xi1>, vector<2x1xi32>
    %c23_i32 = arith.constant 23 : i32
    %404 = arith.subi %403, %400 : vector<2x1xi32>
    %c1_i32_105 = arith.constant 1 : i32
    %405 = vector.broadcast %c1_i32_105 : i32 to vector<2x1xi32>
    %406 = arith.addi %404, %405 : vector<2x1xi32>
    %c1_i32_106 = arith.constant 1 : i32
    %407 = vector.broadcast %c1_i32_106 : i32 to vector<2x1xi32>
    %408 = arith.shrsi %406, %407 : vector<2x1xi32>
    %409 = arith.addi %400, %408 : vector<2x1xi32>
    %410 = vector.broadcast %409 : vector<2x1xi32> to vector<2x256xi32>
    %411 = arith.cmpi sge, %33, %410 : vector<2x256xi32>
    %412 = arith.extui %411 : vector<2x256xi1> to vector<2x256xi32>
    %cst_107 = arith.constant dense<0> : vector<2xi32>
    %413 = vector.multi_reduction <add>, %412, %cst_107 [1] : vector<2x256xi32> to vector<2xi32>
    %414 = vector.shape_cast %413 : vector<2xi32> to vector<2x1xi32>
    %415 = arith.cmpi sge, %414, %30 : vector<2x1xi32>
    %416 = arith.select %415, %409, %400 : vector<2x1xi1>, vector<2x1xi32>
    %c1_i32_108 = arith.constant 1 : i32
    %417 = vector.broadcast %c1_i32_108 : i32 to vector<2x1xi32>
    %418 = arith.subi %409, %417 : vector<2x1xi32>
    %419 = arith.select %415, %403, %418 : vector<2x1xi1>, vector<2x1xi32>
    %c24_i32 = arith.constant 24 : i32
    %420 = arith.subi %419, %416 : vector<2x1xi32>
    %c1_i32_109 = arith.constant 1 : i32
    %421 = vector.broadcast %c1_i32_109 : i32 to vector<2x1xi32>
    %422 = arith.addi %420, %421 : vector<2x1xi32>
    %c1_i32_110 = arith.constant 1 : i32
    %423 = vector.broadcast %c1_i32_110 : i32 to vector<2x1xi32>
    %424 = arith.shrsi %422, %423 : vector<2x1xi32>
    %425 = arith.addi %416, %424 : vector<2x1xi32>
    %426 = vector.broadcast %425 : vector<2x1xi32> to vector<2x256xi32>
    %427 = arith.cmpi sge, %33, %426 : vector<2x256xi32>
    %428 = arith.extui %427 : vector<2x256xi1> to vector<2x256xi32>
    %cst_111 = arith.constant dense<0> : vector<2xi32>
    %429 = vector.multi_reduction <add>, %428, %cst_111 [1] : vector<2x256xi32> to vector<2xi32>
    %430 = vector.shape_cast %429 : vector<2xi32> to vector<2x1xi32>
    %431 = arith.cmpi sge, %430, %30 : vector<2x1xi32>
    %432 = arith.select %431, %425, %416 : vector<2x1xi1>, vector<2x1xi32>
    %c1_i32_112 = arith.constant 1 : i32
    %433 = vector.broadcast %c1_i32_112 : i32 to vector<2x1xi32>
    %434 = arith.subi %425, %433 : vector<2x1xi32>
    %435 = arith.select %431, %419, %434 : vector<2x1xi1>, vector<2x1xi32>
    %c25_i32 = arith.constant 25 : i32
    %436 = arith.subi %435, %432 : vector<2x1xi32>
    %c1_i32_113 = arith.constant 1 : i32
    %437 = vector.broadcast %c1_i32_113 : i32 to vector<2x1xi32>
    %438 = arith.addi %436, %437 : vector<2x1xi32>
    %c1_i32_114 = arith.constant 1 : i32
    %439 = vector.broadcast %c1_i32_114 : i32 to vector<2x1xi32>
    %440 = arith.shrsi %438, %439 : vector<2x1xi32>
    %441 = arith.addi %432, %440 : vector<2x1xi32>
    %442 = vector.broadcast %441 : vector<2x1xi32> to vector<2x256xi32>
    %443 = arith.cmpi sge, %33, %442 : vector<2x256xi32>
    %444 = arith.extui %443 : vector<2x256xi1> to vector<2x256xi32>
    %cst_115 = arith.constant dense<0> : vector<2xi32>
    %445 = vector.multi_reduction <add>, %444, %cst_115 [1] : vector<2x256xi32> to vector<2xi32>
    %446 = vector.shape_cast %445 : vector<2xi32> to vector<2x1xi32>
    %447 = arith.cmpi sge, %446, %30 : vector<2x1xi32>
    %448 = arith.select %447, %441, %432 : vector<2x1xi1>, vector<2x1xi32>
    %c1_i32_116 = arith.constant 1 : i32
    %449 = vector.broadcast %c1_i32_116 : i32 to vector<2x1xi32>
    %450 = arith.subi %441, %449 : vector<2x1xi32>
    %451 = arith.select %447, %435, %450 : vector<2x1xi1>, vector<2x1xi32>
    %c26_i32 = arith.constant 26 : i32
    %452 = arith.subi %451, %448 : vector<2x1xi32>
    %c1_i32_117 = arith.constant 1 : i32
    %453 = vector.broadcast %c1_i32_117 : i32 to vector<2x1xi32>
    %454 = arith.addi %452, %453 : vector<2x1xi32>
    %c1_i32_118 = arith.constant 1 : i32
    %455 = vector.broadcast %c1_i32_118 : i32 to vector<2x1xi32>
    %456 = arith.shrsi %454, %455 : vector<2x1xi32>
    %457 = arith.addi %448, %456 : vector<2x1xi32>
    %458 = vector.broadcast %457 : vector<2x1xi32> to vector<2x256xi32>
    %459 = arith.cmpi sge, %33, %458 : vector<2x256xi32>
    %460 = arith.extui %459 : vector<2x256xi1> to vector<2x256xi32>
    %cst_119 = arith.constant dense<0> : vector<2xi32>
    %461 = vector.multi_reduction <add>, %460, %cst_119 [1] : vector<2x256xi32> to vector<2xi32>
    %462 = vector.shape_cast %461 : vector<2xi32> to vector<2x1xi32>
    %463 = arith.cmpi sge, %462, %30 : vector<2x1xi32>
    %464 = arith.select %463, %457, %448 : vector<2x1xi1>, vector<2x1xi32>
    %c1_i32_120 = arith.constant 1 : i32
    %465 = vector.broadcast %c1_i32_120 : i32 to vector<2x1xi32>
    %466 = arith.subi %457, %465 : vector<2x1xi32>
    %467 = arith.select %463, %451, %466 : vector<2x1xi1>, vector<2x1xi32>
    %c27_i32 = arith.constant 27 : i32
    %468 = arith.subi %467, %464 : vector<2x1xi32>
    %c1_i32_121 = arith.constant 1 : i32
    %469 = vector.broadcast %c1_i32_121 : i32 to vector<2x1xi32>
    %470 = arith.addi %468, %469 : vector<2x1xi32>
    %c1_i32_122 = arith.constant 1 : i32
    %471 = vector.broadcast %c1_i32_122 : i32 to vector<2x1xi32>
    %472 = arith.shrsi %470, %471 : vector<2x1xi32>
    %473 = arith.addi %464, %472 : vector<2x1xi32>
    %474 = vector.broadcast %473 : vector<2x1xi32> to vector<2x256xi32>
    %475 = arith.cmpi sge, %33, %474 : vector<2x256xi32>
    %476 = arith.extui %475 : vector<2x256xi1> to vector<2x256xi32>
    %cst_123 = arith.constant dense<0> : vector<2xi32>
    %477 = vector.multi_reduction <add>, %476, %cst_123 [1] : vector<2x256xi32> to vector<2xi32>
    %478 = vector.shape_cast %477 : vector<2xi32> to vector<2x1xi32>
    %479 = arith.cmpi sge, %478, %30 : vector<2x1xi32>
    %480 = arith.select %479, %473, %464 : vector<2x1xi1>, vector<2x1xi32>
    %c1_i32_124 = arith.constant 1 : i32
    %481 = vector.broadcast %c1_i32_124 : i32 to vector<2x1xi32>
    %482 = arith.subi %473, %481 : vector<2x1xi32>
    %483 = arith.select %479, %467, %482 : vector<2x1xi1>, vector<2x1xi32>
    %c28_i32 = arith.constant 28 : i32
    %484 = arith.subi %483, %480 : vector<2x1xi32>
    %c1_i32_125 = arith.constant 1 : i32
    %485 = vector.broadcast %c1_i32_125 : i32 to vector<2x1xi32>
    %486 = arith.addi %484, %485 : vector<2x1xi32>
    %c1_i32_126 = arith.constant 1 : i32
    %487 = vector.broadcast %c1_i32_126 : i32 to vector<2x1xi32>
    %488 = arith.shrsi %486, %487 : vector<2x1xi32>
    %489 = arith.addi %480, %488 : vector<2x1xi32>
    %490 = vector.broadcast %489 : vector<2x1xi32> to vector<2x256xi32>
    %491 = arith.cmpi sge, %33, %490 : vector<2x256xi32>
    %492 = arith.extui %491 : vector<2x256xi1> to vector<2x256xi32>
    %cst_127 = arith.constant dense<0> : vector<2xi32>
    %493 = vector.multi_reduction <add>, %492, %cst_127 [1] : vector<2x256xi32> to vector<2xi32>
    %494 = vector.shape_cast %493 : vector<2xi32> to vector<2x1xi32>
    %495 = arith.cmpi sge, %494, %30 : vector<2x1xi32>
    %496 = arith.select %495, %489, %480 : vector<2x1xi1>, vector<2x1xi32>
    %c1_i32_128 = arith.constant 1 : i32
    %497 = vector.broadcast %c1_i32_128 : i32 to vector<2x1xi32>
    %498 = arith.subi %489, %497 : vector<2x1xi32>
    %499 = arith.select %495, %483, %498 : vector<2x1xi1>, vector<2x1xi32>
    %c29_i32 = arith.constant 29 : i32
    %500 = arith.subi %499, %496 : vector<2x1xi32>
    %c1_i32_129 = arith.constant 1 : i32
    %501 = vector.broadcast %c1_i32_129 : i32 to vector<2x1xi32>
    %502 = arith.addi %500, %501 : vector<2x1xi32>
    %c1_i32_130 = arith.constant 1 : i32
    %503 = vector.broadcast %c1_i32_130 : i32 to vector<2x1xi32>
    %504 = arith.shrsi %502, %503 : vector<2x1xi32>
    %505 = arith.addi %496, %504 : vector<2x1xi32>
    %506 = vector.broadcast %505 : vector<2x1xi32> to vector<2x256xi32>
    %507 = arith.cmpi sge, %33, %506 : vector<2x256xi32>
    %508 = arith.extui %507 : vector<2x256xi1> to vector<2x256xi32>
    %cst_131 = arith.constant dense<0> : vector<2xi32>
    %509 = vector.multi_reduction <add>, %508, %cst_131 [1] : vector<2x256xi32> to vector<2xi32>
    %510 = vector.shape_cast %509 : vector<2xi32> to vector<2x1xi32>
    %511 = arith.cmpi sge, %510, %30 : vector<2x1xi32>
    %512 = arith.select %511, %505, %496 : vector<2x1xi1>, vector<2x1xi32>
    %c1_i32_132 = arith.constant 1 : i32
    %513 = vector.broadcast %c1_i32_132 : i32 to vector<2x1xi32>
    %514 = arith.subi %505, %513 : vector<2x1xi32>
    %515 = arith.select %511, %499, %514 : vector<2x1xi1>, vector<2x1xi32>
    %c30_i32 = arith.constant 30 : i32
    %516 = arith.subi %515, %512 : vector<2x1xi32>
    %c1_i32_133 = arith.constant 1 : i32
    %517 = vector.broadcast %c1_i32_133 : i32 to vector<2x1xi32>
    %518 = arith.addi %516, %517 : vector<2x1xi32>
    %c1_i32_134 = arith.constant 1 : i32
    %519 = vector.broadcast %c1_i32_134 : i32 to vector<2x1xi32>
    %520 = arith.shrsi %518, %519 : vector<2x1xi32>
    %521 = arith.addi %512, %520 : vector<2x1xi32>
    %522 = vector.broadcast %521 : vector<2x1xi32> to vector<2x256xi32>
    %523 = arith.cmpi sge, %33, %522 : vector<2x256xi32>
    %524 = arith.extui %523 : vector<2x256xi1> to vector<2x256xi32>
    %cst_135 = arith.constant dense<0> : vector<2xi32>
    %525 = vector.multi_reduction <add>, %524, %cst_135 [1] : vector<2x256xi32> to vector<2xi32>
    %526 = vector.shape_cast %525 : vector<2xi32> to vector<2x1xi32>
    %527 = arith.cmpi sge, %526, %30 : vector<2x1xi32>
    %528 = arith.select %527, %521, %512 : vector<2x1xi1>, vector<2x1xi32>
    %c1_i32_136 = arith.constant 1 : i32
    %529 = vector.broadcast %c1_i32_136 : i32 to vector<2x1xi32>
    %530 = arith.subi %521, %529 : vector<2x1xi32>
    %531 = arith.select %527, %515, %530 : vector<2x1xi1>, vector<2x1xi32>
    %c31_i32 = arith.constant 31 : i32
    %532 = arith.subi %531, %528 : vector<2x1xi32>
    %c1_i32_137 = arith.constant 1 : i32
    %533 = vector.broadcast %c1_i32_137 : i32 to vector<2x1xi32>
    %534 = arith.addi %532, %533 : vector<2x1xi32>
    %c1_i32_138 = arith.constant 1 : i32
    %535 = vector.broadcast %c1_i32_138 : i32 to vector<2x1xi32>
    %536 = arith.shrsi %534, %535 : vector<2x1xi32>
    %537 = arith.addi %528, %536 : vector<2x1xi32>
    %538 = vector.broadcast %537 : vector<2x1xi32> to vector<2x256xi32>
    %539 = arith.cmpi sge, %33, %538 : vector<2x256xi32>
    %540 = arith.extui %539 : vector<2x256xi1> to vector<2x256xi32>
    %cst_139 = arith.constant dense<0> : vector<2xi32>
    %541 = vector.multi_reduction <add>, %540, %cst_139 [1] : vector<2x256xi32> to vector<2xi32>
    %542 = vector.shape_cast %541 : vector<2xi32> to vector<2x1xi32>
    %543 = arith.cmpi sge, %542, %30 : vector<2x1xi32>
    %544 = arith.select %543, %537, %528 : vector<2x1xi1>, vector<2x1xi32>
    %c1_i32_140 = arith.constant 1 : i32
    %545 = vector.broadcast %c1_i32_140 : i32 to vector<2x1xi32>
    %546 = arith.subi %537, %545 : vector<2x1xi32>
    %547 = arith.select %543, %531, %546 : vector<2x1xi1>, vector<2x1xi32>
    %548 = vector.broadcast %544 : vector<2x1xi32> to vector<2x256xi32>
    %549 = arith.cmpi sge, %33, %548 : vector<2x256xi32>
    %c0_i32_141 = arith.constant 0 : i32
    %550 = vector.broadcast %c0_i32_141 : i32 to vector<2x1xi32>
    %551 = arith.cmpi sgt, %30, %550 : vector<2x1xi32>
    %552 = vector.broadcast %551 : vector<2x1xi1> to vector<2x256xi1>
    %553 = arith.andi %549, %552 : vector<2x256xi1>
    %554 = arith.ori %21, %553 : vector<2x256xi1>
    %555 = arith.extui %554 : vector<2x256xi1> to vector<2x256xi32>
    %556 = arith.sitofp %555 : vector<2x256xi32> to vector<2x256xf32>
    %557 = arith.mulf %19, %556 : vector<2x256xf32>
    %cst_142 = arith.constant dense<0.000000e+00> : vector<2xf32>
    %558 = vector.multi_reduction <add>, %557, %cst_142 [1] : vector<2x256xf32> to vector<2xf32>
    %559 = vector.shape_cast %558 : vector<2xf32> to vector<2x1xf32>
    %c0_143 = arith.constant 0 : index
    %c0_144 = arith.constant 0 : index
    %c0_145 = arith.constant 0 : index
    %560 = vector.load %arg3[%c0_143, %c0_144, %c0_145] : memref<2x8x256xf32, #tpu.memory_space<vmem>>, vector<2x8x256xf32>
    %c0_146 = arith.constant 0 : index
    %c0_147 = arith.constant 0 : index
    %c0_148 = arith.constant 0 : index
    %561 = vector.load %arg4[%c0_146, %c0_147, %c0_148] : memref<2x8x256xf32, #tpu.memory_space<vmem>>, vector<2x8x256xf32>
    %562 = arith.subf %560, %561 : vector<2x8x256xf32>
    %563 = math.absf %562 : vector<2x8x256xf32>
    %cst_149 = arith.constant 1.000000e+00 : f32
    %564 = vector.broadcast %cst_149 : f32 to vector<2x8x256xf32>
    %565 = arith.cmpf olt, %563, %564 : vector<2x8x256xf32>
    %cst_150 = arith.constant 5.000000e-01 : f32
    %566 = vector.broadcast %cst_150 : f32 to vector<2x8x256xf32>
    %567 = arith.mulf %566, %562 : vector<2x8x256xf32>
    %568 = arith.mulf %567, %562 : vector<2x8x256xf32>
    %cst_151 = arith.constant 5.000000e-01 : f32
    %569 = vector.broadcast %cst_151 : f32 to vector<2x8x256xf32>
    %570 = arith.subf %563, %569 : vector<2x8x256xf32>
    %571 = arith.select %565, %568, %570 : vector<2x8x256xi1>, vector<2x8x256xf32>
    %572 = vector.shape_cast %23 : vector<2x256xf32> to vector<2x1x256xf32>
    %573 = vector.broadcast %572 : vector<2x1x256xf32> to vector<2x8x256xf32>
    %574 = arith.mulf %571, %573 : vector<2x8x256xf32>
    %cst_152 = arith.constant dense<0.000000e+00> : vector<2x8xf32>
    %575 = vector.multi_reduction <add>, %574, %cst_152 [2] : vector<2x8x256xf32> to vector<2x8xf32>
    %cst_153 = arith.constant dense<0.000000e+00> : vector<2xf32>
    %576 = vector.multi_reduction <add>, %575, %cst_153 [1] : vector<2x8xf32> to vector<2xf32>
    %577 = vector.shape_cast %576 : vector<2xf32> to vector<2x1xf32>
    %578 = tpu.iota {dimensions = array<i32: 2>} : vector<1x1x128xi32>
    %c0_i32_154 = arith.constant 0 : i32
    %579 = vector.broadcast %c0_i32_154 : i32 to vector<1x1x128xi32>
    %580 = arith.cmpi eq, %578, %579 : vector<1x1x128xi32>
    %581 = vector.shape_cast %559 : vector<2x1xf32> to vector<2x1x1xf32>
    %cst_155 = arith.constant 0.000000e+00 : f32
    %582 = vector.shape_cast %580 : vector<1x1x128xi1> to vector<1x1x128xi1>
    %583 = vector.broadcast %582 : vector<1x1x128xi1> to vector<2x1x128xi1>
    %584 = vector.shape_cast %581 : vector<2x1x1xf32> to vector<2x1x1xf32>
    %585 = vector.broadcast %584 : vector<2x1x1xf32> to vector<2x1x128xf32>
    %586 = vector.broadcast %cst_155 : f32 to vector<2x1x128xf32>
    %587 = arith.select %583, %585, %586 : vector<2x1x128xi1>, vector<2x1x128xf32>
    %c1_i32_156 = arith.constant 1 : i32
    %588 = vector.broadcast %c1_i32_156 : i32 to vector<1x1x128xi32>
    %589 = arith.cmpi eq, %578, %588 : vector<1x1x128xi32>
    %590 = vector.shape_cast %577 : vector<2x1xf32> to vector<2x1x1xf32>
    %cst_157 = arith.constant 0.000000e+00 : f32
    %591 = vector.shape_cast %589 : vector<1x1x128xi1> to vector<1x1x128xi1>
    %592 = vector.broadcast %591 : vector<1x1x128xi1> to vector<2x1x128xi1>
    %593 = vector.shape_cast %590 : vector<2x1x1xf32> to vector<2x1x1xf32>
    %594 = vector.broadcast %593 : vector<2x1x1xf32> to vector<2x1x128xf32>
    %595 = vector.broadcast %cst_157 : f32 to vector<2x1x128xf32>
    %596 = arith.select %592, %594, %595 : vector<2x1x128xi1>, vector<2x1x128xf32>
    %597 = arith.addf %587, %596 : vector<2x1x128xf32>
    %c2_i32_158 = arith.constant 2 : i32
    %598 = vector.broadcast %c2_i32_158 : i32 to vector<1x1x128xi32>
    %599 = arith.cmpi eq, %578, %598 : vector<1x1x128xi32>
    %600 = arith.sitofp %26 : vector<2x1xi32> to vector<2x1xf32>
    %601 = vector.shape_cast %600 : vector<2x1xf32> to vector<2x1x1xf32>
    %cst_159 = arith.constant 0.000000e+00 : f32
    %602 = vector.shape_cast %599 : vector<1x1x128xi1> to vector<1x1x128xi1>
    %603 = vector.broadcast %602 : vector<1x1x128xi1> to vector<2x1x128xi1>
    %604 = vector.shape_cast %601 : vector<2x1x1xf32> to vector<2x1x1xf32>
    %605 = vector.broadcast %604 : vector<2x1x1xf32> to vector<2x1x128xf32>
    %606 = vector.broadcast %cst_159 : f32 to vector<2x1x128xf32>
    %607 = arith.select %603, %605, %606 : vector<2x1x128xi1>, vector<2x1x128xf32>
    %608 = arith.addf %597, %607 : vector<2x1x128xf32>
    %c0_160 = arith.constant 0 : index
    %c0_161 = arith.constant 0 : index
    %c0_162 = arith.constant 0 : index
    %609 = vector.load %arg5[%c0_160, %c0_161, %c0_162] : memref<2x1x128xf32, #tpu.memory_space<vmem>>, vector<2x1x128xf32>
    tpu.vector_store %arg5[%c0_160, %c0_161, %c0_162], %608 {strides = array<i32>} : memref<2x1x128xf32, #tpu.memory_space<vmem>>, vector<2x1x128xf32>,
    return
  }
  func.func @transform_0(%arg0: i32) -> (i32, i32, i32) {
    %c0_i32 = arith.constant 0 : i32
    %c0_i32_0 = arith.constant 0 : i32
    %c0_i32_1 = arith.constant 0 : i32
    return %arg0, %c0_i32, %c0_i32_0 : i32, i32, i32
  }
  func.func @transform_1(%arg0: i32) -> (i32, i32, i32) {
    %c0_i32 = arith.constant 0 : i32
    %c0_i32_0 = arith.constant 0 : i32
    %c0_i32_1 = arith.constant 0 : i32
    return %arg0, %c0_i32, %c0_i32_0 : i32, i32, i32
  }
  func.func @transform_2(%arg0: i32) -> (i32, i32, i32) {
    %c0_i32 = arith.constant 0 : i32
    %c0_i32_0 = arith.constant 0 : i32
    %c0_i32_1 = arith.constant 0 : i32
    return %arg0, %c0_i32, %c0_i32_0 : i32, i32, i32
  }
  func.func @transform_3(%arg0: i32) -> (i32, i32, i32) {
    %c0_i32 = arith.constant 0 : i32
    %c0_i32_0 = arith.constant 0 : i32
    %c0_i32_1 = arith.constant 0 : i32
    return %arg0, %c0_i32, %c0_i32_0 : i32, i32, i32
  }
  func.func @transform_4(%arg0: i32) -> (i32, i32, i32) {
    %c0_i32 = arith.constant 0 : i32
    %c0_i32_0 = arith.constant 0 : i32
    %c0_i32_1 = arith.constant 0 : i32
    return %arg0, %c0_i32, %c0_i32_0 : i32, i32, i32
  }
}

</mosaic_0001>

<llo_original>
// kernel: tpu_custom_call.1
$region0: #{tpu_custom_call.1}
  #allocation0 [shape = 'u32[]', space=smem, size = 0x4, offset = 0x4, fixed_abs, tag = 'smem constant byte address 0x4 - core index']
  #allocation1 [shape = 'u32[144,128]{1,0:T(1,128)}', space=vmem, size = 0x12000, scoped, tag = 'internal scratch']
  %s0 = inlined_call_operand.hbm [shape: f32[2,4,256], index: 0, kind: input, shape index: {}]
  %s1 = inlined_call_operand.hbm [shape: s32[2,1,256], index: 1, kind: input, shape index: {}]
  %s2 = inlined_call_operand.hbm [shape: f32[2,8,256], index: 2, kind: input, shape index: {}]
  %s3 = inlined_call_operand.hbm [shape: f32[2,8,256], index: 3, kind: input, shape index: {}]
  %s4 = inlined_call_operand.hbm [shape: f32[2,1,128], index: 4, kind: output, shape index: {}]
  %s5 = sld [smem:[#allocation0]]
  $region42: #{tpu_custom_call.1} parent=0
    _
  %s7 = ssub.s32 1, %s5
  %s8 = scalar_select 0, %s7, %s5
  $region1: #{tpu_custom_call.1} parent=0
    #allocation2 [shape = 'u8[8192]{0}', space=vmem, size = 0x2000, scoped, tag = 'input window, operand 0, single buffered']
    #allocation3 [shape = 's32[1]{0}', space=sflag, size = 0x4, scoped, tag = 'scoped memory for tpu_custom_call.1']
    #allocation4 [shape = 's32[1]{0}', space=sflag, size = 0x4, scoped, tag = 'scoped memory for tpu_custom_call.1']
    #allocation5 [shape = 'u8[2048]{0}', space=vmem, size = 0x800, scoped, tag = 'input window, operand 1, single buffered']
    #allocation6 [shape = 's32[1]{0}', space=sflag, size = 0x4, scoped, tag = 'scoped memory for tpu_custom_call.1']
    #allocation7 [shape = 'u8[16384]{0}', space=vmem, size = 0x4000, scoped, tag = 'input window, operand 2, single buffered']
    #allocation8 [shape = 'u8[16384]{0}', space=vmem, size = 0x4000, scoped, tag = 'input window, operand 3, single buffered']
    #allocation9 [shape = 's32[1]{0}', space=sflag, size = 0x4, scoped, tag = 'scoped memory for tpu_custom_call.1']
    #allocation10 [shape = 'u8[1024]{0}', space=vmem, size = 0x400, scoped, tag = 'output window, operand 0, single buffered']
    %9 = vsyncpa [#allocation3], 0
    %10 = vsyncpa [#allocation6], 0
    %11 = vsyncpa [#allocation9], 0
    %12 = vsyncpa [#allocation4], 0
    // Predicated region
    $region2: #{tpu_custom_call.1} parent=1 // pred_check
      _
    $region3: #{tpu_custom_call.1} parent=1 // pred_check_branch
      %14 = sbr.rel (0) target = $region5
    $region4: #{tpu_custom_call.1} parent=1 // pred_region
      %s16 = ssub.s32 256, 256
      %17 = vsyncadd [#allocation3], %s16
      %s18 = sshll.u32 [#allocation2], 4
      %s19 = int_to_ptr.vmem [resolvable:$true] %s18
      %24 = dma.hbm_to_vmem [thread:$0]  %s0, 256, %s19, [#allocation3], 128, 128, 8
    $region5: #{tpu_custom_call.1} parent=1 // pred_fallthru
      _
    // Predicated region
    $region6: #{tpu_custom_call.1} parent=1 // pred_check
      _
    $region7: #{tpu_custom_call.1} parent=1 // pred_check_branch
      %26 = sbr.rel (0) target = $region9
    $region8: #{tpu_custom_call.1} parent=1 // pred_region
      %s28 = ssub.s32 64, 64
      %29 = vsyncadd [#allocation6], %s28
      %s30 = sshll.u32 [#allocation5], 4
      %s31 = int_to_ptr.vmem [resolvable:$true] %s30
      %36 = dma.hbm_to_vmem [thread:$0]  %s1, 64, %s31, [#allocation6], 32, 32, 2
    $region9: #{tpu_custom_call.1} parent=1 // pred_fallthru
      _
    // Predicated region
    $region10: #{tpu_custom_call.1} parent=1 // pred_check
      _
    $region11: #{tpu_custom_call.1} parent=1 // pred_check_branch
      %38 = sbr.rel (0) target = $region13
    $region12: #{tpu_custom_call.1} parent=1 // pred_region
      %s40 = ssub.s32 512, 512
      %41 = vsyncadd [#allocation6], %s40
      %s42 = sshll.u32 [#allocation7], 4
      %s43 = int_to_ptr.vmem [resolvable:$true] %s42
      %48 = dma.hbm_to_vmem [thread:$0]  %s2, 512, %s43, [#allocation6], 256, 256, 16
    $region13: #{tpu_custom_call.1} parent=1 // pred_fallthru
      _
    // Predicated region
    $region14: #{tpu_custom_call.1} parent=1 // pred_check
      _
    $region15: #{tpu_custom_call.1} parent=1 // pred_check_branch
      %50 = sbr.rel (0) target = $region17
    $region16: #{tpu_custom_call.1} parent=1 // pred_region
      %s52 = ssub.s32 512, 512
      %53 = vsyncadd [#allocation9], %s52
      %s54 = sshll.u32 [#allocation8], 4
      %s55 = int_to_ptr.vmem [resolvable:$true] %s54
      %60 = dma.hbm_to_vmem [thread:$0]  %s3, 512, %s55, [#allocation9], 256, 256, 16
    $region17: #{tpu_custom_call.1} parent=1 // pred_fallthru
      _
    // Predicated region
    $region18: #{tpu_custom_call.1} parent=1 // pred_check
      _
    $region19: #{tpu_custom_call.1} parent=1 // pred_check_branch
      %62 = sbr.rel (0) target = $region21
    $region20: #{tpu_custom_call.1} parent=1 // pred_region
      %63 = dma.done [#allocation3], 256
    $region21: #{tpu_custom_call.1} parent=1 // pred_fallthru
      _
    // Predicated region
    $region22: #{tpu_custom_call.1} parent=1 // pred_check
      _
    $region23: #{tpu_custom_call.1} parent=1 // pred_check_branch
      %65 = sbr.rel (0) target = $region25
    $region24: #{tpu_custom_call.1} parent=1 // pred_region
      %66 = dma.done [#allocation6], 64
    $region25: #{tpu_custom_call.1} parent=1 // pred_fallthru
      _
    // Predicated region
    $region26: #{tpu_custom_call.1} parent=1 // pred_check
      _
    $region27: #{tpu_custom_call.1} parent=1 // pred_check_branch
      %68 = sbr.rel (0) target = $region29
    $region28: #{tpu_custom_call.1} parent=1 // pred_region
      %69 = dma.done [#allocation6], 512
    $region29: #{tpu_custom_call.1} parent=1 // pred_fallthru
      _
    // Predicated region
    $region30: #{tpu_custom_call.1} parent=1 // pred_check
      _
    $region31: #{tpu_custom_call.1} parent=1 // pred_check_branch
      %71 = sbr.rel (0) target = $region33
    $region32: #{tpu_custom_call.1} parent=1 // pred_region
      %72 = dma.done [#allocation9], 512
    $region33: #{tpu_custom_call.1} parent=1 // pred_fallthru
      _
    %v73 = vld [vmem:[#allocation2] sm:$0xff]
    %v74 = vld [vmem:[#allocation2 + $0x8] sm:$0xff]
    %v75 = vld [vmem:[#allocation5] sm:$0x3]
    %v76 = vld [vmem:[#allocation5 + $0x2] sm:$0x3]
    %v79 = vcombine.high %v73, %v73
    %v80 = vcombine.high %v74, %v74
    %vm83 = vcmask 1043456
    %v84 = vsel %vm83, %v73, -inf
    %v85 = vrot.slane %v84, 4
    %v86 = vmax.f32 %v84, %v85
    %v87 = vrot.slane %v86, 2
    %v88 = vmax.f32 %v86, %v87
    %v89 = vrot.slane %v88, 1
    %v90 = vmax.f32 %v88, %v89
    %v91 = vsel %vm83, %v79, -inf
    %v92 = vrot.slane %v91, 4
    %v93 = vmax.f32 %v91, %v92
    %v94 = vrot.slane %v93, 2
    %v95 = vmax.f32 %v93, %v94
    %v96 = vrot.slane %v95, 1
    %v97 = vmax.f32 %v95, %v96
    %v98 = vsel %vm83, %v74, -inf
    %v99 = vrot.slane %v98, 4
    %v100 = vmax.f32 %v98, %v99
    %v101 = vrot.slane %v100, 2
    %v102 = vmax.f32 %v100, %v101
    %v103 = vrot.slane %v102, 1
    %v104 = vmax.f32 %v102, %v103
    %v105 = vsel %vm83, %v80, -inf
    %v106 = vrot.slane %v105, 4
    %v107 = vmax.f32 %v105, %v106
    %v108 = vrot.slane %v107, 2
    %v109 = vmax.f32 %v107, %v108
    %v110 = vrot.slane %v109, 1
    %v111 = vmax.f32 %v109, %v110
    %v116 = vcombine.low %v90, %v97
    %v117 = vcombine.low %v104, %v111
    %v120 = vsub.f32 %v73, %v116
    %v121 = vsub.f32 %v74, %v117
    %v122 = vmul.f32 %v120, 1.442695
    %v123 = vpow.pop %v122
    %v124 = vmul.f32 %v121, 1.442695
    %v125 = vpow.pop %v124
    %v128 = vcombine.high %v123, %v123
    %v129 = vcombine.high %v125, %v125
    %v132 = vsel %vm83, %v123, 0.0
    %v133 = vrot.slane %v132, 4
    %v134 = vadd.f32 %v132, %v133
    %v135 = vrot.slane %v134, 2
    %v136 = vadd.f32 %v134, %v135
    %v137 = vrot.slane %v136, 1
    %v138 = vadd.f32 %v136, %v137
    %v139 = vsel %vm83, %v128, 0.0
    %v140 = vrot.slane %v139, 4
    %v141 = vadd.f32 %v139, %v140
    %v142 = vrot.slane %v141, 2
    %v143 = vadd.f32 %v141, %v142
    %v144 = vrot.slane %v143, 1
    %v145 = vadd.f32 %v143, %v144
    %v146 = vsel %vm83, %v125, 0.0
    %v147 = vrot.slane %v146, 4
    %v148 = vadd.f32 %v146, %v147
    %v149 = vrot.slane %v148, 2
    %v150 = vadd.f32 %v148, %v149
    %v151 = vrot.slane %v150, 1
    %v152 = vadd.f32 %v150, %v151
    %v153 = vsel %vm83, %v129, 0.0
    %v154 = vrot.slane %v153, 4
    %v155 = vadd.f32 %v153, %v154
    %v156 = vrot.slane %v155, 2
    %v157 = vadd.f32 %v155, %v156
    %v158 = vrot.slane %v157, 1
    %v159 = vadd.f32 %v157, %v158
    %v160 = vlog2.pop %v138
    %v161 = vmul.f32 %v160, 0.6931472
    %v162 = vlog2.pop %v145
    %v163 = vmul.f32 %v162, 0.6931472
    %v164 = vlog2.pop %v152
    %v165 = vmul.f32 %v164, 0.6931472
    %v166 = vlog2.pop %v159
    %v167 = vmul.f32 %v166, 0.6931472
    %v168 = vadd.f32 %v161, %v90
    %v169 = vadd.f32 %v163, %v97
    %v170 = vadd.f32 %v165, %v104
    %v171 = vadd.f32 %v167, %v111
    %v172 = vlaneseq
    %v173 = vshrl.u32 %v172, 7
    %v174 = vlaneseq
    %v175 = vshrl.u32 %v174, 7
    %v176 = vsub.s32 0, %v175
    %v177 = vrot.slane %v75, %v176
    %v178 = vlaneseq
    %v179 = vshrl.u32 %v178, 7
    %v180 = vsub.s32 1, %v179
    %v181 = vrot.slane %v75, %v180
    %v182 = vlaneseq
    %v183 = vshrl.u32 %v182, 7
    %v184 = vsub.s32 0, %v183
    %v185 = vrot.slane %v76, %v184
    %v186 = vlaneseq
    %v187 = vshrl.u32 %v186, 7
    %v188 = vsub.s32 1, %v187
    %v189 = vrot.slane %v76, %v188
    %vm190 = vcmp.eq.s32.totalorder %v173, %v177
    %vm191 = vcmp.eq.s32.totalorder %v173, %v181
    %vm192 = vcmp.eq.s32.totalorder %v173, %v185
    %vm193 = vcmp.eq.s32.totalorder %v173, %v189
    %v194 = vsel %vm190, %v73, 0.0
    %v195 = vsel %vm191, %v79, 0.0
    %v196 = vsel %vm192, %v74, 0.0
    %v197 = vsel %vm193, %v80, 0.0
    %v198 = vsel %vm83, %v194, 0.0
    %v199 = vrot.slane %v198, 4
    %v200 = vadd.f32 %v198, %v199
    %v201 = vrot.slane %v200, 2
    %v202 = vadd.f32 %v200, %v201
    %v203 = vrot.slane %v202, 1
    %v204 = vadd.f32 %v202, %v203
    %v205 = vsel %vm83, %v195, 0.0
    %v206 = vrot.slane %v205, 4
    %v207 = vadd.f32 %v205, %v206
    %v208 = vrot.slane %v207, 2
    %v209 = vadd.f32 %v207, %v208
    %v210 = vrot.slane %v209, 1
    %v211 = vadd.f32 %v209, %v210
    %v212 = vsel %vm83, %v196, 0.0
    %v213 = vrot.slane %v212, 4
    %v214 = vadd.f32 %v212, %v213
    %v215 = vrot.slane %v214, 2
    %v216 = vadd.f32 %v214, %v215
    %v217 = vrot.slane %v216, 1
    %v218 = vadd.f32 %v216, %v217
    %v219 = vsel %vm83, %v197, 0.0
    %v220 = vrot.slane %v219, 4
    %v221 = vadd.f32 %v219, %v220
    %v222 = vrot.slane %v221, 2
    %v223 = vadd.f32 %v221, %v222
    %v224 = vrot.slane %v223, 1
    %v225 = vadd.f32 %v223, %v224
    %v226 = vsub.f32 %v168, %v204
    %v227 = vsub.f32 %v169, %v211
    %v228 = vsub.f32 %v170, %v218
    %v229 = vsub.f32 %v171, %v225
    %vm230 = vcmp.gt.s32.totalorder %v75, 0
    %vm231 = vcmp.gt.s32.totalorder %v76, 0
    %v232 = vsel %vm230, 1, 0
    %v233 = vsel %vm231, 1, 0
    %v234 = vcvt.s32.f32 %v232
    %v235 = vcvt.s32.f32 %v233
    %v236 = vcombine.low %v232, %v233
    %v238 = vunpack.c.l.s4 1966171168
    %v239 = vunpack.c.0.s8 %v238
    %v240 = vlaneseq
    %v241 = vshrl.u32 %v240, 7
    %v242 = vsub.s32 %v239, %v241
    %v243 = vrot.slane %v236, %v242
    %v244 = vcombine.high %v243, %v243
    %v246 = vunpack.c.l.s4 1966171168
    %v247 = vunpack.c.0.s8 %v246
    %v248 = vlaneseq
    %v249 = vshrl.u32 %v248, 7
    %v250 = vsub.s32 %v247, %v249
    %v251 = vrot.slane %v243, %v250
    %v253 = vunpack.c.l.s4 1966171168
    %v254 = vunpack.c.0.s8 %v253
    %v255 = vlaneseq
    %v256 = vshrl.u32 %v255, 7
    %v257 = vsub.s32 %v254, %v256
    %v258 = vrot.slane %v244, %v257
    %vm259 = vcmask 1041408
    %v260 = vsel %vm259, %v251, 0
    %v261 = vsel %vm259, %v258, 0
    %v262 = vadd.s32 %v260, %v261
    %v263 = vand.u32 %v262, 65535
    %v264 = vshrl.u32 %v262, 16
    %v265 = vcvt.s32.f32 %v263
    %v266 = vcvt.s32.f32 %v264
    %267 = vadd.xlane.f32.xlu0 %v265
    %v268 = vpop.xlane.xlu0 %267
    %269 = vadd.xlane.f32.xlu0 %v266
    %v270 = vpop.xlane.xlu0 %269
    %v271 = vcvt.f32.s32 %v268
    %v272 = vcvt.f32.s32 %v270
    %v273 = vshll.u32 %v272, 16
    %v274 = vadd.s32 %v273, %v271
    %v275 = vmul.u32 %v274, 3
    %vm276 = vcmp.lt.s32.totalorder %v275, 255
    %v277 = vsel %vm276, %v275, 255
    %v282 = vcombine.low %v226, %v227
    %v284 = vunpack.c.l.s4 1966171168
    %v285 = vunpack.c.0.s8 %v284
    %v286 = vlaneseq
    %v287 = vshrl.u32 %v286, 7
    %v288 = vsub.s32 %v285, %v287
    %v289 = vrot.slane %v282, %v288
    %v291 = vunpack.c.l.s4 1966171168
    %v292 = vunpack.c.0.s8 %v291
    %v293 = vlaneseq
    %v294 = vshrl.u32 %v293, 7
    %v295 = vsub.s32 %v292, %v294
    %v296 = vrot.slane %v289, %v295
    %v297 = vcombine.low %v228, %v229
    %v299 = vunpack.c.l.s4 1966171168
    %v300 = vunpack.c.0.s8 %v299
    %v301 = vlaneseq
    %v302 = vshrl.u32 %v301, 7
    %v303 = vsub.s32 %v300, %v302
    %v304 = vrot.slane %v297, %v303
    %v306 = vunpack.c.l.s4 1966171168
    %v307 = vunpack.c.0.s8 %v306
    %v308 = vlaneseq
    %v309 = vshrl.u32 %v308, 7
    %v310 = vsub.s32 %v307, %v309
    %v311 = vrot.slane %v304, %v310
    %v314 = vsel %vm230, 0.0, %v296
    %v315 = vsel %vm231, 0.0, %v311
    %v318 = vlaneseq
    %v319 = vshrl.u32 %v318, 7
    %v320 = vsub.s32 0, %v319
    %v321 = vrot.slane %v314, %v320
    %v322 = vlaneseq
    %v323 = vshrl.u32 %v322, 7
    %v324 = vsub.s32 1, %v323
    %v325 = vrot.slane %v314, %v324
    %v326 = vlaneseq
    %v327 = vshrl.u32 %v326, 7
    %v328 = vsub.s32 0, %v327
    %v329 = vrot.slane %v315, %v328
    %v330 = vlaneseq
    %v331 = vshrl.u32 %v330, 7
    %v332 = vsub.s32 1, %v331
    %v333 = vrot.slane %v315, %v332
    %vm334 = vcmp.ge.s32.totalorder %v321, 1069547520
    %vm335 = vcmp.ge.s32.totalorder %v325, 1069547520
    %vm336 = vcmp.ge.s32.totalorder %v329, 1069547520
    %vm337 = vcmp.ge.s32.totalorder %v333, 1069547520
    %v338 = vsel %vm334, 1, 0
    %v339 = vsel %vm335, 1, 0
    %v340 = vsel %vm336, 1, 0
    %v341 = vsel %vm337, 1, 0
    %v342 = vrot.slane %v340, 7
    %vm343 = vcmask 1041409
    %v344 = vsel %vm343, %v342, %v338
    %v345 = vrot.slane %v341, 7
    %v346 = vsel %vm343, %v345, %v339
    %v347 = vsel %vm259, %v344, 0
    %v348 = vsel %vm259, %v346, 0
    %v349 = vadd.s32 %v347, %v348
    %v350 = vand.u32 %v349, 65535
    %v351 = vshrl.u32 %v349, 16
    %v352 = vcvt.s32.f32 %v350
    %v353 = vcvt.s32.f32 %v351
    %354 = vadd.xlane.f32.xlu0 %v352
    %v355 = vpop.xlane.xlu0 %354
    %356 = vadd.xlane.f32.xlu0 %v353
    %v357 = vpop.xlane.xlu0 %356
    %v358 = vcvt.f32.s32 %v355
    %v359 = vcvt.f32.s32 %v357
    %v360 = vshll.u32 %v359, 16
    %v361 = vadd.s32 %v360, %v358
    %vm362 = vcmp.ge.s32.totalorder %v361, %v277
    %v363 = vsel %vm362, 1069547520, 0
    %v364 = vsel %vm362, 2139095039, 1069547519
    %v365 = vsub.s32 %v364, %v363
    %v366 = vadd.s32 %v365, 1
    %v367 = vshra.s32 %v366, 1
    %v368 = vadd.s32 %v363, %v367
    %v369 = vrot.slane %v368, 1
    %vm370 = vcmp.ge.s32.totalorder %v321, %v368
    %vm371 = vcmp.ge.s32.totalorder %v325, %v368
    %vm372 = vcmp.ge.s32.totalorder %v329, %v369
    %vm373 = vcmp.ge.s32.totalorder %v333, %v369
    %v374 = vsel %vm370, 1, 0
    %v375 = vsel %vm371, 1, 0
    %v376 = vsel %vm372, 1, 0
    %v377 = vsel %vm373, 1, 0
    %v378 = vrot.slane %v376, 7
    %v379 = vsel %vm343, %v378, %v374
    %v380 = vrot.slane %v377, 7
    %v381 = vsel %vm343, %v380, %v375
    %v382 = vsel %vm259, %v379, 0
    %v383 = vsel %vm259, %v381, 0
    %v384 = vadd.s32 %v382, %v383
    %v385 = vand.u32 %v384, 65535
    %v386 = vshrl.u32 %v384, 16
    %v387 = vcvt.s32.f32 %v385
    %v388 = vcvt.s32.f32 %v386
    %389 = vadd.xlane.f32.xlu0 %v387
    %v390 = vpop.xlane.xlu0 %389
    %391 = vadd.xlane.f32.xlu0 %v388
    %v392 = vpop.xlane.xlu0 %391
    %v393 = vcvt.f32.s32 %v390
    %v394 = vcvt.f32.s32 %v392
    %v395 = vshll.u32 %v394, 16
    %v396 = vadd.s32 %v395, %v393
    %vm397 = vcmp.ge.s32.totalorder %v396, %v277
    %v398 = vsel %vm397, %v368, %v363
    %v399 = vsub.s32 %v368, 1
    %v400 = vsel %vm397, %v364, %v399
    %v401 = vsub.s32 %v400, %v398
    %v402 = vadd.s32 %v401, 1
    %v403 = vshra.s32 %v402, 1
    %v404 = vadd.s32 %v398, %v403
    %v405 = vrot.slane %v404, 1
    %vm406 = vcmp.ge.s32.totalorder %v321, %v404
    %vm407 = vcmp.ge.s32.totalorder %v325, %v404
    %vm408 = vcmp.ge.s32.totalorder %v329, %v405
    %vm409 = vcmp.ge.s32.totalorder %v333, %v405
    %v410 = vsel %vm406, 1, 0
    %v411 = vsel %vm407, 1, 0
    %v412 = vsel %vm408, 1, 0
    %v413 = vsel %vm409, 1, 0
    %v414 = vrot.slane %v412, 7
    %v415 = vsel %vm343, %v414, %v410
    %v416 = vrot.slane %v413, 7
    %v417 = vsel %vm343, %v416, %v411
    %v418 = vsel %vm259, %v415, 0
    %v419 = vsel %vm259, %v417, 0
    %v420 = vadd.s32 %v418, %v419
    %v421 = vand.u32 %v420, 65535
    %v422 = vshrl.u32 %v420, 16
    %v423 = vcvt.s32.f32 %v421
    %v424 = vcvt.s32.f32 %v422
    %425 = vadd.xlane.f32.xlu0 %v423
    %v426 = vpop.xlane.xlu0 %425
    %427 = vadd.xlane.f32.xlu0 %v424
    %v428 = vpop.xlane.xlu0 %427
    %v429 = vcvt.f32.s32 %v426
    %v430 = vcvt.f32.s32 %v428
    %v431 = vshll.u32 %v430, 16
    %v432 = vadd.s32 %v431, %v429
    %vm433 = vcmp.ge.s32.totalorder %v432, %v277
    %v434 = vsel %vm433, %v404, %v398
    %v435 = vsub.s32 %v404, 1
    %v436 = vsel %vm433, %v400, %v435
    %v437 = vsub.s32 %v436, %v434
    %v438 = vadd.s32 %v437, 1
    %v439 = vshra.s32 %v438, 1
    %v440 = vadd.s32 %v434, %v439
    %v441 = vrot.slane %v440, 1
    %vm442 = vcmp.ge.s32.totalorder %v321, %v440
    %vm443 = vcmp.ge.s32.totalorder %v325, %v440
    %vm444 = vcmp.ge.s32.totalorder %v329, %v441
    %vm445 = vcmp.ge.s32.totalorder %v333, %v441
    %v446 = vsel %vm442, 1, 0
    %v447 = vsel %vm443, 1, 0
    %v448 = vsel %vm444, 1, 0
    %v449 = vsel %vm445, 1, 0
    %v450 = vrot.slane %v448, 7
    %v451 = vsel %vm343, %v450, %v446
    %v452 = vrot.slane %v449, 7
    %v453 = vsel %vm343, %v452, %v447
    %v454 = vsel %vm259, %v451, 0
    %v455 = vsel %vm259, %v453, 0
    %v456 = vadd.s32 %v454, %v455
    %v457 = vand.u32 %v456, 65535
    %v458 = vshrl.u32 %v456, 16
    %v459 = vcvt.s32.f32 %v457
    %v460 = vcvt.s32.f32 %v458
    %461 = vadd.xlane.f32.xlu0 %v459
    %v462 = vpop.xlane.xlu0 %461
    %463 = vadd.xlane.f32.xlu0 %v460
    %v464 = vpop.xlane.xlu0 %463
    %v465 = vcvt.f32.s32 %v462
    %v466 = vcvt.f32.s32 %v464
    %v467 = vshll.u32 %v466, 16
    %v468 = vadd.s32 %v467, %v465
    %vm469 = vcmp.ge.s32.totalorder %v468, %v277
    %v470 = vsel %vm469, %v440, %v434
    %v471 = vsub.s32 %v440, 1
    %v472 = vsel %vm469, %v436, %v471
    %v473 = vsub.s32 %v472, %v470
    %v474 = vadd.s32 %v473, 1
    %v475 = vshra.s32 %v474, 1
    %v476 = vadd.s32 %v470, %v475
    %v477 = vrot.slane %v476, 1
    %vm478 = vcmp.ge.s32.totalorder %v321, %v476
    %vm479 = vcmp.ge.s32.totalorder %v325, %v476
    %vm480 = vcmp.ge.s32.totalorder %v329, %v477
    %vm481 = vcmp.ge.s32.totalorder %v333, %v477
    %v482 = vsel %vm478, 1, 0
    %v483 = vsel %vm479, 1, 0
    %v484 = vsel %vm480, 1, 0
    %v485 = vsel %vm481, 1, 0
    %v486 = vrot.slane %v484, 7
    %v487 = vsel %vm343, %v486, %v482
    %v488 = vrot.slane %v485, 7
    %v489 = vsel %vm343, %v488, %v483
    %v490 = vsel %vm259, %v487, 0
    %v491 = vsel %vm259, %v489, 0
    %v492 = vadd.s32 %v490, %v491
    %v493 = vand.u32 %v492, 65535
    %v494 = vshrl.u32 %v492, 16
    %v495 = vcvt.s32.f32 %v493
    %v496 = vcvt.s32.f32 %v494
    %497 = vadd.xlane.f32.xlu0 %v495
    %v498 = vpop.xlane.xlu0 %497
    %499 = vadd.xlane.f32.xlu0 %v496
    %v500 = vpop.xlane.xlu0 %499
    %v501 = vcvt.f32.s32 %v498
    %v502 = vcvt.f32.s32 %v500
    %v503 = vshll.u32 %v502, 16
    %v504 = vadd.s32 %v503, %v501
    %vm505 = vcmp.ge.s32.totalorder %v504, %v277
    %v506 = vsel %vm505, %v476, %v470
    %v507 = vsub.s32 %v476, 1
    %v508 = vsel %vm505, %v472, %v507
    %v509 = vsub.s32 %v508, %v506
    %v510 = vadd.s32 %v509, 1
    %v511 = vshra.s32 %v510, 1
    %v512 = vadd.s32 %v506, %v511
    %v513 = vrot.slane %v512, 1
    %vm514 = vcmp.ge.s32.totalorder %v321, %v512
    %vm515 = vcmp.ge.s32.totalorder %v325, %v512
    %vm516 = vcmp.ge.s32.totalorder %v329, %v513
    %vm517 = vcmp.ge.s32.totalorder %v333, %v513
    %v518 = vsel %vm514, 1, 0
    %v519 = vsel %vm515, 1, 0
    %v520 = vsel %vm516, 1, 0
    %v521 = vsel %vm517, 1, 0
    %v522 = vrot.slane %v520, 7
    %v523 = vsel %vm343, %v522, %v518
    %v524 = vrot.slane %v521, 7
    %v525 = vsel %vm343, %v524, %v519
    %v526 = vsel %vm259, %v523, 0
    %v527 = vsel %vm259, %v525, 0
    %v528 = vadd.s32 %v526, %v527
    %v529 = vand.u32 %v528, 65535
    %v530 = vshrl.u32 %v528, 16
    %v531 = vcvt.s32.f32 %v529
    %v532 = vcvt.s32.f32 %v530
    %533 = vadd.xlane.f32.xlu0 %v531
    %v534 = vpop.xlane.xlu0 %533
    %535 = vadd.xlane.f32.xlu0 %v532
    %v536 = vpop.xlane.xlu0 %535
    %v537 = vcvt.f32.s32 %v534
    %v538 = vcvt.f32.s32 %v536
    %v539 = vshll.u32 %v538, 16
    %v540 = vadd.s32 %v539, %v537
    %vm541 = vcmp.ge.s32.totalorder %v540, %v277
    %v542 = vsel %vm541, %v512, %v506
    %v543 = vsub.s32 %v512, 1
    %v544 = vsel %vm541, %v508, %v543
    %v545 = vsub.s32 %v544, %v542
    %v546 = vadd.s32 %v545, 1
    %v547 = vshra.s32 %v546, 1
    %v548 = vadd.s32 %v542, %v547
    %v549 = vrot.slane %v548, 1
    %vm550 = vcmp.ge.s32.totalorder %v321, %v548
    %vm551 = vcmp.ge.s32.totalorder %v325, %v548
    %vm552 = vcmp.ge.s32.totalorder %v329, %v549
    %vm553 = vcmp.ge.s32.totalorder %v333, %v549
    %v554 = vsel %vm550, 1, 0
    %v555 = vsel %vm551, 1, 0
    %v556 = vsel %vm552, 1, 0
    %v557 = vsel %vm553, 1, 0
    %v558 = vrot.slane %v556, 7
    %v559 = vsel %vm343, %v558, %v554
    %v560 = vrot.slane %v557, 7
    %v561 = vsel %vm343, %v560, %v555
    %v562 = vsel %vm259, %v559, 0
    %v563 = vsel %vm259, %v561, 0
    %v564 = vadd.s32 %v562, %v563
    %v565 = vand.u32 %v564, 65535
    %v566 = vshrl.u32 %v564, 16
    %v567 = vcvt.s32.f32 %v565
    %v568 = vcvt.s32.f32 %v566
    %569 = vadd.xlane.f32.xlu0 %v567
    %v570 = vpop.xlane.xlu0 %569
    %571 = vadd.xlane.f32.xlu0 %v568
    %v572 = vpop.xlane.xlu0 %571
    %v573 = vcvt.f32.s32 %v570
    %v574 = vcvt.f32.s32 %v572
    %v575 = vshll.u32 %v574, 16
    %v576 = vadd.s32 %v575, %v573
    %vm577 = vcmp.ge.s32.totalorder %v576, %v277
    %v578 = vsel %vm577, %v548, %v542
    %v579 = vsub.s32 %v548, 1
    %v580 = vsel %vm577, %v544, %v579
    %v581 = vsub.s32 %v580, %v578
    %v582 = vadd.s32 %v581, 1
    %v583 = vshra.s32 %v582, 1
    %v584 = vadd.s32 %v578, %v583
    %v585 = vrot.slane %v584, 1
    %vm586 = vcmp.ge.s32.totalorder %v321, %v584
    %vm587 = vcmp.ge.s32.totalorder %v325, %v584
    %vm588 = vcmp.ge.s32.totalorder %v329, %v585
    %vm589 = vcmp.ge.s32.totalorder %v333, %v585
    %v590 = vsel %vm586, 1, 0
    %v591 = vsel %vm587, 1, 0
    %v592 = vsel %vm588, 1, 0
    %v593 = vsel %vm589, 1, 0
    %v594 = vrot.slane %v592, 7
    %v595 = vsel %vm343, %v594, %v590
    %v596 = vrot.slane %v593, 7
    %v597 = vsel %vm343, %v596, %v591
    %v598 = vsel %vm259, %v595, 0
    %v599 = vsel %vm259, %v597, 0
    %v600 = vadd.s32 %v598, %v599
    %v601 = vand.u32 %v600, 65535
    %v602 = vshrl.u32 %v600, 16
    %v603 = vcvt.s32.f32 %v601
    %v604 = vcvt.s32.f32 %v602
    %605 = vadd.xlane.f32.xlu0 %v603
    %v606 = vpop.xlane.xlu0 %605
    %607 = vadd.xlane.f32.xlu0 %v604
    %v608 = vpop.xlane.xlu0 %607
    %v609 = vcvt.f32.s32 %v606
    %v610 = vcvt.f32.s32 %v608
    %v611 = vshll.u32 %v610, 16
    %v612 = vadd.s32 %v611, %v609
    %vm613 = vcmp.ge.s32.totalorder %v612, %v277
    %v614 = vsel %vm613, %v584, %v578
    %v615 = vsub.s32 %v584, 1
    %v616 = vsel %vm613, %v580, %v615
    %v617 = vsub.s32 %v616, %v614
    %v618 = vadd.s32 %v617, 1
    %v619 = vshra.s32 %v618, 1
    %v620 = vadd.s32 %v614, %v619
    %v621 = vrot.slane %v620, 1
    %vm622 = vcmp.ge.s32.totalorder %v321, %v620
    %vm623 = vcmp.ge.s32.totalorder %v325, %v620
    %vm624 = vcmp.ge.s32.totalorder %v329, %v621
    %vm625 = vcmp.ge.s32.totalorder %v333, %v621
    %v626 = vsel %vm622, 1, 0
    %v627 = vsel %vm623, 1, 0
    %v628 = vsel %vm624, 1, 0
    %v629 = vsel %vm625, 1, 0
    %v630 = vrot.slane %v628, 7
    %v631 = vsel %vm343, %v630, %v626
    %v632 = vrot.slane %v629, 7
    %v633 = vsel %vm343, %v632, %v627
    %v634 = vsel %vm259, %v631, 0
    %v635 = vsel %vm259, %v633, 0
    %v636 = vadd.s32 %v634, %v635
    %v637 = vand.u32 %v636, 65535
    %v638 = vshrl.u32 %v636, 16
    %v639 = vcvt.s32.f32 %v637
    %v640 = vcvt.s32.f32 %v638
    %641 = vadd.xlane.f32.xlu0 %v639
    %v642 = vpop.xlane.xlu0 %641
    %643 = vadd.xlane.f32.xlu0 %v640
    %v644 = vpop.xlane.xlu0 %643
    %v645 = vcvt.f32.s32 %v642
    %v646 = vcvt.f32.s32 %v644
    %v647 = vshll.u32 %v646, 16
    %v648 = vadd.s32 %v647, %v645
    %vm649 = vcmp.ge.s32.totalorder %v648, %v277
    %v650 = vsel %vm649, %v620, %v614
    %v651 = vsub.s32 %v620, 1
    %v652 = vsel %vm649, %v616, %v651
    %v653 = vsub.s32 %v652, %v650
    %v654 = vadd.s32 %v653, 1
    %v655 = vshra.s32 %v654, 1
    %v656 = vadd.s32 %v650, %v655
    %v657 = vrot.slane %v656, 1
    %vm658 = vcmp.ge.s32.totalorder %v321, %v656
    %vm659 = vcmp.ge.s32.totalorder %v325, %v656
    %vm660 = vcmp.ge.s32.totalorder %v329, %v657
    %vm661 = vcmp.ge.s32.totalorder %v333, %v657
    %v662 = vsel %vm658, 1, 0
    %v663 = vsel %vm659, 1, 0
    %v664 = vsel %vm660, 1, 0
    %v665 = vsel %vm661, 1, 0
    %v666 = vrot.slane %v664, 7
    %v667 = vsel %vm343, %v666, %v662
    %v668 = vrot.slane %v665, 7
    %v669 = vsel %vm343, %v668, %v663
    %v670 = vsel %vm259, %v667, 0
    %v671 = vsel %vm259, %v669, 0
    %v672 = vadd.s32 %v670, %v671
    %v673 = vand.u32 %v672, 65535
    %v674 = vshrl.u32 %v672, 16
    %v675 = vcvt.s32.f32 %v673
    %v676 = vcvt.s32.f32 %v674
    %677 = vadd.xlane.f32.xlu0 %v675
    %v678 = vpop.xlane.xlu0 %677
    %679 = vadd.xlane.f32.xlu0 %v676
    %v680 = vpop.xlane.xlu0 %679
    %v681 = vcvt.f32.s32 %v678
    %v682 = vcvt.f32.s32 %v680
    %v683 = vshll.u32 %v682, 16
    %v684 = vadd.s32 %v683, %v681
    %vm685 = vcmp.ge.s32.totalorder %v684, %v277
    %v686 = vsel %vm685, %v656, %v650
    %v687 = vsub.s32 %v656, 1
    %v688 = vsel %vm685, %v652, %v687
    %v689 = vsub.s32 %v688, %v686
    %v690 = vadd.s32 %v689, 1
    %v691 = vshra.s32 %v690, 1
    %v692 = vadd.s32 %v686, %v691
    %v693 = vrot.slane %v692, 1
    %vm694 = vcmp.ge.s32.totalorder %v321, %v692
    %vm695 = vcmp.ge.s32.totalorder %v325, %v692
    %vm696 = vcmp.ge.s32.totalorder %v329, %v693
    %vm697 = vcmp.ge.s32.totalorder %v333, %v693
    %v698 = vsel %vm694, 1, 0
    %v699 = vsel %vm695, 1, 0
    %v700 = vsel %vm696, 1, 0
    %v701 = vsel %vm697, 1, 0
    %v702 = vrot.slane %v700, 7
    %v703 = vsel %vm343, %v702, %v698
    %v704 = vrot.slane %v701, 7
    %v705 = vsel %vm343, %v704, %v699
    %v706 = vsel %vm259, %v703, 0
    %v707 = vsel %vm259, %v705, 0
    %v708 = vadd.s32 %v706, %v707
    %v709 = vand.u32 %v708, 65535
    %v710 = vshrl.u32 %v708, 16
    %v711 = vcvt.s32.f32 %v709
    %v712 = vcvt.s32.f32 %v710
    %713 = vadd.xlane.f32.xlu0 %v711
    %v714 = vpop.xlane.xlu0 %713
    %715 = vadd.xlane.f32.xlu0 %v712
    %v716 = vpop.xlane.xlu0 %715
    %v717 = vcvt.f32.s32 %v714
    %v718 = vcvt.f32.s32 %v716
    %v719 = vshll.u32 %v718, 16
    %v720 = vadd.s32 %v719, %v717
    %vm721 = vcmp.ge.s32.totalorder %v720, %v277
    %v722 = vsel %vm721, %v692, %v686
    %v723 = vsub.s32 %v692, 1
    %v724 = vsel %vm721, %v688, %v723
    %v725 = vsub.s32 %v724, %v722
    %v726 = vadd.s32 %v725, 1
    %v727 = vshra.s32 %v726, 1
    %v728 = vadd.s32 %v722, %v727
    %v729 = vrot.slane %v728, 1
    %vm730 = vcmp.ge.s32.totalorder %v321, %v728
    %vm731 = vcmp.ge.s32.totalorder %v325, %v728
    %vm732 = vcmp.ge.s32.totalorder %v329, %v729
    %vm733 = vcmp.ge.s32.totalorder %v333, %v729
    %v734 = vsel %vm730, 1, 0
    %v735 = vsel %vm731, 1, 0
    %v736 = vsel %vm732, 1, 0
    %v737 = vsel %vm733, 1, 0
    %v738 = vrot.slane %v736, 7
    %v739 = vsel %vm343, %v738, %v734
    %v740 = vrot.slane %v737, 7
    %v741 = vsel %vm343, %v740, %v735
    %v742 = vsel %vm259, %v739, 0
    %v743 = vsel %vm259, %v741, 0
    %v744 = vadd.s32 %v742, %v743
    %v745 = vand.u32 %v744, 65535
    %v746 = vshrl.u32 %v744, 16
    %v747 = vcvt.s32.f32 %v745
    %v748 = vcvt.s32.f32 %v746
    %749 = vadd.xlane.f32.xlu0 %v747
    %v750 = vpop.xlane.xlu0 %749
    %751 = vadd.xlane.f32.xlu0 %v748
    %v752 = vpop.xlane.xlu0 %751
    %v753 = vcvt.f32.s32 %v750
    %v754 = vcvt.f32.s32 %v752
    %v755 = vshll.u32 %v754, 16
    %v756 = vadd.s32 %v755, %v753
    %vm757 = vcmp.ge.s32.totalorder %v756, %v277
    %v758 = vsel %vm757, %v728, %v722
    %v759 = vsub.s32 %v728, 1
    %v760 = vsel %vm757, %v724, %v759
    %v761 = vsub.s32 %v760, %v758
    %v762 = vadd.s32 %v761, 1
    %v763 = vshra.s32 %v762, 1
    %v764 = vadd.s32 %v758, %v763
    %v765 = vrot.slane %v764, 1
    %vm766 = vcmp.ge.s32.totalorder %v321, %v764
    %vm767 = vcmp.ge.s32.totalorder %v325, %v764
    %vm768 = vcmp.ge.s32.totalorder %v329, %v765
    %vm769 = vcmp.ge.s32.totalorder %v333, %v765
    %v770 = vsel %vm766, 1, 0
    %v771 = vsel %vm767, 1, 0
    %v772 = vsel %vm768, 1, 0
    %v773 = vsel %vm769, 1, 0
    %v774 = vrot.slane %v772, 7
    %v775 = vsel %vm343, %v774, %v770
    %v776 = vrot.slane %v773, 7
    %v777 = vsel %vm343, %v776, %v771
    %v778 = vsel %vm259, %v775, 0
    %v779 = vsel %vm259, %v777, 0
    %v780 = vadd.s32 %v778, %v779
    %v781 = vand.u32 %v780, 65535
    %v782 = vshrl.u32 %v780, 16
    %v783 = vcvt.s32.f32 %v781
    %v784 = vcvt.s32.f32 %v782
    %785 = vadd.xlane.f32.xlu0 %v783
    %v786 = vpop.xlane.xlu0 %785
    %787 = vadd.xlane.f32.xlu0 %v784
    %v788 = vpop.xlane.xlu0 %787
    %v789 = vcvt.f32.s32 %v786
    %v790 = vcvt.f32.s32 %v788
    %v791 = vshll.u32 %v790, 16
    %v792 = vadd.s32 %v791, %v789
    %vm793 = vcmp.ge.s32.totalorder %v792, %v277
    %v794 = vsel %vm793, %v764, %v758
    %v795 = vsub.s32 %v764, 1
    %v796 = vsel %vm793, %v760, %v795
    %v797 = vsub.s32 %v796, %v794
    %v798 = vadd.s32 %v797, 1
    %v799 = vshra.s32 %v798, 1
    %v800 = vadd.s32 %v794, %v799
    %v801 = vrot.slane %v800, 1
    %vm802 = vcmp.ge.s32.totalorder %v321, %v800
    %vm803 = vcmp.ge.s32.totalorder %v325, %v800
    %vm804 = vcmp.ge.s32.totalorder %v329, %v801
    %vm805 = vcmp.ge.s32.totalorder %v333, %v801
    %v806 = vsel %vm802, 1, 0
    %v807 = vsel %vm803, 1, 0
    %v808 = vsel %vm804, 1, 0
    %v809 = vsel %vm805, 1, 0
    %v810 = vrot.slane %v808, 7
    %v811 = vsel %vm343, %v810, %v806
    %v812 = vrot.slane %v809, 7
    %v813 = vsel %vm343, %v812, %v807
    %v814 = vsel %vm259, %v811, 0
    %v815 = vsel %vm259, %v813, 0
    %v816 = vadd.s32 %v814, %v815
    %v817 = vand.u32 %v816, 65535
    %v818 = vshrl.u32 %v816, 16
    %v819 = vcvt.s32.f32 %v817
    %v820 = vcvt.s32.f32 %v818
    %821 = vadd.xlane.f32.xlu0 %v819
    %v822 = vpop.xlane.xlu0 %821
    %823 = vadd.xlane.f32.xlu0 %v820
    %v824 = vpop.xlane.xlu0 %823
    %v825 = vcvt.f32.s32 %v822
    %v826 = vcvt.f32.s32 %v824
    %v827 = vshll.u32 %v826, 16
    %v828 = vadd.s32 %v827, %v825
    %vm829 = vcmp.ge.s32.totalorder %v828, %v277
    %v830 = vsel %vm829, %v800, %v794
    %v831 = vsub.s32 %v800, 1
    %v832 = vsel %vm829, %v796, %v831
    %v833 = vsub.s32 %v832, %v830
    %v834 = vadd.s32 %v833, 1
    %v835 = vshra.s32 %v834, 1
    %v836 = vadd.s32 %v830, %v835
    %v837 = vrot.slane %v836, 1
    %vm838 = vcmp.ge.s32.totalorder %v321, %v836
    %vm839 = vcmp.ge.s32.totalorder %v325, %v836
    %vm840 = vcmp.ge.s32.totalorder %v329, %v837
    %vm841 = vcmp.ge.s32.totalorder %v333, %v837
    %v842 = vsel %vm838, 1, 0
    %v843 = vsel %vm839, 1, 0
    %v844 = vsel %vm840, 1, 0
    %v845 = vsel %vm841, 1, 0
    %v846 = vrot.slane %v844, 7
    %v847 = vsel %vm343, %v846, %v842
    %v848 = vrot.slane %v845, 7
    %v849 = vsel %vm343, %v848, %v843
    %v850 = vsel %vm259, %v847, 0
    %v851 = vsel %vm259, %v849, 0
    %v852 = vadd.s32 %v850, %v851
    %v853 = vand.u32 %v852, 65535
    %v854 = vshrl.u32 %v852, 16
    %v855 = vcvt.s32.f32 %v853
    %v856 = vcvt.s32.f32 %v854
    %857 = vadd.xlane.f32.xlu0 %v855
    %v858 = vpop.xlane.xlu0 %857
    %859 = vadd.xlane.f32.xlu0 %v856
    %v860 = vpop.xlane.xlu0 %859
    %v861 = vcvt.f32.s32 %v858
    %v862 = vcvt.f32.s32 %v860
    %v863 = vshll.u32 %v862, 16
    %v864 = vadd.s32 %v863, %v861
    %vm865 = vcmp.ge.s32.totalorder %v864, %v277
    %v866 = vsel %vm865, %v836, %v830
    %v867 = vsub.s32 %v836, 1
    %v868 = vsel %vm865, %v832, %v867
    %v869 = vsub.s32 %v868, %v866
    %v870 = vadd.s32 %v869, 1
    %v871 = vshra.s32 %v870, 1
    %v872 = vadd.s32 %v866, %v871
    %v873 = vrot.slane %v872, 1
    %vm874 = vcmp.ge.s32.totalorder %v321, %v872
    %vm875 = vcmp.ge.s32.totalorder %v325, %v872
    %vm876 = vcmp.ge.s32.totalorder %v329, %v873
    %vm877 = vcmp.ge.s32.totalorder %v333, %v873
    %v878 = vsel %vm874, 1, 0
    %v879 = vsel %vm875, 1, 0
    %v880 = vsel %vm876, 1, 0
    %v881 = vsel %vm877, 1, 0
    %v882 = vrot.slane %v880, 7
    %v883 = vsel %vm343, %v882, %v878
    %v884 = vrot.slane %v881, 7
    %v885 = vsel %vm343, %v884, %v879
    %v886 = vsel %vm259, %v883, 0
    %v887 = vsel %vm259, %v885, 0
    %v888 = vadd.s32 %v886, %v887
    %v889 = vand.u32 %v888, 65535
    %v890 = vshrl.u32 %v888, 16
    %v891 = vcvt.s32.f32 %v889
    %v892 = vcvt.s32.f32 %v890
    %893 = vadd.xlane.f32.xlu0 %v891
    %v894 = vpop.xlane.xlu0 %893
    %895 = vadd.xlane.f32.xlu0 %v892
    %v896 = vpop.xlane.xlu0 %895
    %v897 = vcvt.f32.s32 %v894
    %v898 = vcvt.f32.s32 %v896
    %v899 = vshll.u32 %v898, 16
    %v900 = vadd.s32 %v899, %v897
    %vm901 = vcmp.ge.s32.totalorder %v900, %v277
    %v902 = vsel %vm901, %v872, %v866
    %v903 = vsub.s32 %v872, 1
    %v904 = vsel %vm901, %v868, %v903
    %v905 = vsub.s32 %v904, %v902
    %v906 = vadd.s32 %v905, 1
    %v907 = vshra.s32 %v906, 1
    %v908 = vadd.s32 %v902, %v907
    %v909 = vrot.slane %v908, 1
    %vm910 = vcmp.ge.s32.totalorder %v321, %v908
    %vm911 = vcmp.ge.s32.totalorder %v325, %v908
    %vm912 = vcmp.ge.s32.totalorder %v329, %v909
    %vm913 = vcmp.ge.s32.totalorder %v333, %v909
    %v914 = vsel %vm910, 1, 0
    %v915 = vsel %vm911, 1, 0
    %v916 = vsel %vm912, 1, 0
    %v917 = vsel %vm913, 1, 0
    %v918 = vrot.slane %v916, 7
    %v919 = vsel %vm343, %v918, %v914
    %v920 = vrot.slane %v917, 7
    %v921 = vsel %vm343, %v920, %v915
    %v922 = vsel %vm259, %v919, 0
    %v923 = vsel %vm259, %v921, 0
    %v924 = vadd.s32 %v922, %v923
    %v925 = vand.u32 %v924, 65535
    %v926 = vshrl.u32 %v924, 16
    %v927 = vcvt.s32.f32 %v925
    %v928 = vcvt.s32.f32 %v926
    %929 = vadd.xlane.f32.xlu0 %v927
    %v930 = vpop.xlane.xlu0 %929
    %931 = vadd.xlane.f32.xlu0 %v928
    %v932 = vpop.xlane.xlu0 %931
    %v933 = vcvt.f32.s32 %v930
    %v934 = vcvt.f32.s32 %v932
    %v935 = vshll.u32 %v934, 16
    %v936 = vadd.s32 %v935, %v933
    %vm937 = vcmp.ge.s32.totalorder %v936, %v277
    %v938 = vsel %vm937, %v908, %v902
    %v939 = vsub.s32 %v908, 1
    %v940 = vsel %vm937, %v904, %v939
    %v941 = vsub.s32 %v940, %v938
    %v942 = vadd.s32 %v941, 1
    %v943 = vshra.s32 %v942, 1
    %v944 = vadd.s32 %v938, %v943
    %v945 = vrot.slane %v944, 1
    %vm946 = vcmp.ge.s32.totalorder %v321, %v944
    %vm947 = vcmp.ge.s32.totalorder %v325, %v944
    %vm948 = vcmp.ge.s32.totalorder %v329, %v945
    %vm949 = vcmp.ge.s32.totalorder %v333, %v945
    %v950 = vsel %vm946, 1, 0
    %v951 = vsel %vm947, 1, 0
    %v952 = vsel %vm948, 1, 0
    %v953 = vsel %vm949, 1, 0
    %v954 = vrot.slane %v952, 7
    %v955 = vsel %vm343, %v954, %v950
    %v956 = vrot.slane %v953, 7
    %v957 = vsel %vm343, %v956, %v951
    %v958 = vsel %vm259, %v955, 0
    %v959 = vsel %vm259, %v957, 0
    %v960 = vadd.s32 %v958, %v959
    %v961 = vand.u32 %v960, 65535
    %v962 = vshrl.u32 %v960, 16
    %v963 = vcvt.s32.f32 %v961
    %v964 = vcvt.s32.f32 %v962
    %965 = vadd.xlane.f32.xlu0 %v963
    %v966 = vpop.xlane.xlu0 %965
    %967 = vadd.xlane.f32.xlu0 %v964
    %v968 = vpop.xlane.xlu0 %967
    %v969 = vcvt.f32.s32 %v966
    %v970 = vcvt.f32.s32 %v968
    %v971 = vshll.u32 %v970, 16
    %v972 = vadd.s32 %v971, %v969
    %vm973 = vcmp.ge.s32.totalorder %v972, %v277
    %v974 = vsel %vm973, %v944, %v938
    %v975 = vsub.s32 %v944, 1
    %v976 = vsel %vm973, %v940, %v975
    %v977 = vsub.s32 %v976, %v974
    %v978 = vadd.s32 %v977, 1
    %v979 = vshra.s32 %v978, 1
    %v980 = vadd.s32 %v974, %v979
    %v981 = vrot.slane %v980, 1
    %vm982 = vcmp.ge.s32.totalorder %v321, %v980
    %vm983 = vcmp.ge.s32.totalorder %v325, %v980
    %vm984 = vcmp.ge.s32.totalorder %v329, %v981
    %vm985 = vcmp.ge.s32.totalorder %v333, %v981
    %v986 = vsel %vm982, 1, 0
    %v987 = vsel %vm983, 1, 0
    %v988 = vsel %vm984, 1, 0
    %v989 = vsel %vm985, 1, 0
    %v990 = vrot.slane %v988, 7
    %v991 = vsel %vm343, %v990, %v986
    %v992 = vrot.slane %v989, 7
    %v993 = vsel %vm343, %v992, %v987
    %v994 = vsel %vm259, %v991, 0
    %v995 = vsel %vm259, %v993, 0
    %v996 = vadd.s32 %v994, %v995
    %v997 = vand.u32 %v996, 65535
    %v998 = vshrl.u32 %v996, 16
    %v999 = vcvt.s32.f32 %v997
    %v1000 = vcvt.s32.f32 %v998
    %1001 = vadd.xlane.f32.xlu0 %v999
    %v1002 = vpop.xlane.xlu0 %1001
    %1003 = vadd.xlane.f32.xlu0 %v1000
    %v1004 = vpop.xlane.xlu0 %1003
    %v1005 = vcvt.f32.s32 %v1002
    %v1006 = vcvt.f32.s32 %v1004
    %v1007 = vshll.u32 %v1006, 16
    %v1008 = vadd.s32 %v1007, %v1005
    %vm1009 = vcmp.ge.s32.totalorder %v1008, %v277
    %v1010 = vsel %vm1009, %v980, %v974
    %v1011 = vsub.s32 %v980, 1
    %v1012 = vsel %vm1009, %v976, %v1011
    %v1013 = vsub.s32 %v1012, %v1010
    %v1014 = vadd.s32 %v1013, 1
    %v1015 = vshra.s32 %v1014, 1
    %v1016 = vadd.s32 %v1010, %v1015
    %v1017 = vrot.slane %v1016, 1
    %vm1018 = vcmp.ge.s32.totalorder %v321, %v1016
    %vm1019 = vcmp.ge.s32.totalorder %v325, %v1016
    %vm1020 = vcmp.ge.s32.totalorder %v329, %v1017
    %vm1021 = vcmp.ge.s32.totalorder %v333, %v1017
    %v1022 = vsel %vm1018, 1, 0
    %v1023 = vsel %vm1019, 1, 0
    %v1024 = vsel %vm1020, 1, 0
    %v1025 = vsel %vm1021, 1, 0
    %v1026 = vrot.slane %v1024, 7
    %v1027 = vsel %vm343, %v1026, %v1022
    %v1028 = vrot.slane %v1025, 7
    %v1029 = vsel %vm343, %v1028, %v1023
    %v1030 = vsel %vm259, %v1027, 0
    %v1031 = vsel %vm259, %v1029, 0
    %v1032 = vadd.s32 %v1030, %v1031
    %v1033 = vand.u32 %v1032, 65535
    %v1034 = vshrl.u32 %v1032, 16
    %v1035 = vcvt.s32.f32 %v1033
    %v1036 = vcvt.s32.f32 %v1034
    %1037 = vadd.xlane.f32.xlu0 %v1035
    %v1038 = vpop.xlane.xlu0 %1037
    %1039 = vadd.xlane.f32.xlu0 %v1036
    %v1040 = vpop.xlane.xlu0 %1039
    %v1041 = vcvt.f32.s32 %v1038
    %v1042 = vcvt.f32.s32 %v1040
    %v1043 = vshll.u32 %v1042, 16
    %v1044 = vadd.s32 %v1043, %v1041
    %vm1045 = vcmp.ge.s32.totalorder %v1044, %v277
    %v1046 = vsel %vm1045, %v1016, %v1010
    %v1047 = vsub.s32 %v1016, 1
    %v1048 = vsel %vm1045, %v1012, %v1047
    %v1049 = vsub.s32 %v1048, %v1046
    %v1050 = vadd.s32 %v1049, 1
    %v1051 = vshra.s32 %v1050, 1
    %v1052 = vadd.s32 %v1046, %v1051
    %v1053 = vrot.slane %v1052, 1
    %vm1054 = vcmp.ge.s32.totalorder %v321, %v1052
    %vm1055 = vcmp.ge.s32.totalorder %v325, %v1052
    %vm1056 = vcmp.ge.s32.totalorder %v329, %v1053
    %vm1057 = vcmp.ge.s32.totalorder %v333, %v1053
    %v1058 = vsel %vm1054, 1, 0
    %v1059 = vsel %vm1055, 1, 0
    %v1060 = vsel %vm1056, 1, 0
    %v1061 = vsel %vm1057, 1, 0
    %v1062 = vrot.slane %v1060, 7
    %v1063 = vsel %vm343, %v1062, %v1058
    %v1064 = vrot.slane %v1061, 7
    %v1065 = vsel %vm343, %v1064, %v1059
    %v1066 = vsel %vm259, %v1063, 0
    %v1067 = vsel %vm259, %v1065, 0
    %v1068 = vadd.s32 %v1066, %v1067
    %v1069 = vand.u32 %v1068, 65535
    %v1070 = vshrl.u32 %v1068, 16
    %v1071 = vcvt.s32.f32 %v1069
    %v1072 = vcvt.s32.f32 %v1070
    %1073 = vadd.xlane.f32.xlu0 %v1071
    %v1074 = vpop.xlane.xlu0 %1073
    %1075 = vadd.xlane.f32.xlu0 %v1072
    %v1076 = vpop.xlane.xlu0 %1075
    %v1077 = vcvt.f32.s32 %v1074
    %v1078 = vcvt.f32.s32 %v1076
    %v1079 = vshll.u32 %v1078, 16
    %v1080 = vadd.s32 %v1079, %v1077
    %vm1081 = vcmp.ge.s32.totalorder %v1080, %v277
    %v1082 = vsel %vm1081, %v1052, %v1046
    %v1083 = vsub.s32 %v1052, 1
    %v1084 = vsel %vm1081, %v1048, %v1083
    %v1085 = vsub.s32 %v1084, %v1082
    %v1086 = vadd.s32 %v1085, 1
    %v1087 = vshra.s32 %v1086, 1
    %v1088 = vadd.s32 %v1082, %v1087
    %v1089 = vrot.slane %v1088, 1
    %vm1090 = vcmp.ge.s32.totalorder %v321, %v1088
    %vm1091 = vcmp.ge.s32.totalorder %v325, %v1088
    %vm1092 = vcmp.ge.s32.totalorder %v329, %v1089
    %vm1093 = vcmp.ge.s32.totalorder %v333, %v1089
    %v1094 = vsel %vm1090, 1, 0
    %v1095 = vsel %vm1091, 1, 0
    %v1096 = vsel %vm1092, 1, 0
    %v1097 = vsel %vm1093, 1, 0
    %v1098 = vrot.slane %v1096, 7
    %v1099 = vsel %vm343, %v1098, %v1094
    %v1100 = vrot.slane %v1097, 7
    %v1101 = vsel %vm343, %v1100, %v1095
    %v1102 = vsel %vm259, %v1099, 0
    %v1103 = vsel %vm259, %v1101, 0
    %v1104 = vadd.s32 %v1102, %v1103
    %v1105 = vand.u32 %v1104, 65535
    %v1106 = vshrl.u32 %v1104, 16
    %v1107 = vcvt.s32.f32 %v1105
    %v1108 = vcvt.s32.f32 %v1106
    %1109 = vadd.xlane.f32.xlu0 %v1107
    %v1110 = vpop.xlane.xlu0 %1109
    %1111 = vadd.xlane.f32.xlu0 %v1108
    %v1112 = vpop.xlane.xlu0 %1111
    %v1113 = vcvt.f32.s32 %v1110
    %v1114 = vcvt.f32.s32 %v1112
    %v1115 = vshll.u32 %v1114, 16
    %v1116 = vadd.s32 %v1115, %v1113
    %vm1117 = vcmp.ge.s32.totalorder %v1116, %v277
    %v1118 = vsel %vm1117, %v1088, %v1082
    %v1119 = vsub.s32 %v1088, 1
    %v1120 = vsel %vm1117, %v1084, %v1119
    %v1121 = vsub.s32 %v1120, %v1118
    %v1122 = vadd.s32 %v1121, 1
    %v1123 = vshra.s32 %v1122, 1
    %v1124 = vadd.s32 %v1118, %v1123
    %v1125 = vrot.slane %v1124, 1
    %vm1126 = vcmp.ge.s32.totalorder %v321, %v1124
    %vm1127 = vcmp.ge.s32.totalorder %v325, %v1124
    %vm1128 = vcmp.ge.s32.totalorder %v329, %v1125
    %vm1129 = vcmp.ge.s32.totalorder %v333, %v1125
    %v1130 = vsel %vm1126, 1, 0
    %v1131 = vsel %vm1127, 1, 0
    %v1132 = vsel %vm1128, 1, 0
    %v1133 = vsel %vm1129, 1, 0
    %v1134 = vrot.slane %v1132, 7
    %v1135 = vsel %vm343, %v1134, %v1130
    %v1136 = vrot.slane %v1133, 7
    %v1137 = vsel %vm343, %v1136, %v1131
    %v1138 = vsel %vm259, %v1135, 0
    %v1139 = vsel %vm259, %v1137, 0
    %v1140 = vadd.s32 %v1138, %v1139
    %v1141 = vand.u32 %v1140, 65535
    %v1142 = vshrl.u32 %v1140, 16
    %v1143 = vcvt.s32.f32 %v1141
    %v1144 = vcvt.s32.f32 %v1142
    %1145 = vadd.xlane.f32.xlu0 %v1143
    %v1146 = vpop.xlane.xlu0 %1145
    %1147 = vadd.xlane.f32.xlu0 %v1144
    %v1148 = vpop.xlane.xlu0 %1147
    %v1149 = vcvt.f32.s32 %v1146
    %v1150 = vcvt.f32.s32 %v1148
    %v1151 = vshll.u32 %v1150, 16
    %v1152 = vadd.s32 %v1151, %v1149
    %vm1153 = vcmp.ge.s32.totalorder %v1152, %v277
    %v1154 = vsel %vm1153, %v1124, %v1118
    %v1155 = vsub.s32 %v1124, 1
    %v1156 = vsel %vm1153, %v1120, %v1155
    %v1157 = vsub.s32 %v1156, %v1154
    %v1158 = vadd.s32 %v1157, 1
    %v1159 = vshra.s32 %v1158, 1
    %v1160 = vadd.s32 %v1154, %v1159
    %v1161 = vrot.slane %v1160, 1
    %vm1162 = vcmp.ge.s32.totalorder %v321, %v1160
    %vm1163 = vcmp.ge.s32.totalorder %v325, %v1160
    %vm1164 = vcmp.ge.s32.totalorder %v329, %v1161
    %vm1165 = vcmp.ge.s32.totalorder %v333, %v1161
    %v1166 = vsel %vm1162, 1, 0
    %v1167 = vsel %vm1163, 1, 0
    %v1168 = vsel %vm1164, 1, 0
    %v1169 = vsel %vm1165, 1, 0
    %v1170 = vrot.slane %v1168, 7
    %v1171 = vsel %vm343, %v1170, %v1166
    %v1172 = vrot.slane %v1169, 7
    %v1173 = vsel %vm343, %v1172, %v1167
    %v1174 = vsel %vm259, %v1171, 0
    %v1175 = vsel %vm259, %v1173, 0
    %v1176 = vadd.s32 %v1174, %v1175
    %v1177 = vand.u32 %v1176, 65535
    %v1178 = vshrl.u32 %v1176, 16
    %v1179 = vcvt.s32.f32 %v1177
    %v1180 = vcvt.s32.f32 %v1178
    %1181 = vadd.xlane.f32.xlu0 %v1179
    %v1182 = vpop.xlane.xlu0 %1181
    %1183 = vadd.xlane.f32.xlu0 %v1180
    %v1184 = vpop.xlane.xlu0 %1183
    %v1185 = vcvt.f32.s32 %v1182
    %v1186 = vcvt.f32.s32 %v1184
    %v1187 = vshll.u32 %v1186, 16
    %v1188 = vadd.s32 %v1187, %v1185
    %vm1189 = vcmp.ge.s32.totalorder %v1188, %v277
    %v1190 = vsel %vm1189, %v1160, %v1154
    %v1191 = vsub.s32 %v1160, 1
    %v1192 = vsel %vm1189, %v1156, %v1191
    %v1193 = vsub.s32 %v1192, %v1190
    %v1194 = vadd.s32 %v1193, 1
    %v1195 = vshra.s32 %v1194, 1
    %v1196 = vadd.s32 %v1190, %v1195
    %v1197 = vrot.slane %v1196, 1
    %vm1198 = vcmp.ge.s32.totalorder %v321, %v1196
    %vm1199 = vcmp.ge.s32.totalorder %v325, %v1196
    %vm1200 = vcmp.ge.s32.totalorder %v329, %v1197
    %vm1201 = vcmp.ge.s32.totalorder %v333, %v1197
    %v1202 = vsel %vm1198, 1, 0
    %v1203 = vsel %vm1199, 1, 0
    %v1204 = vsel %vm1200, 1, 0
    %v1205 = vsel %vm1201, 1, 0
    %v1206 = vrot.slane %v1204, 7
    %v1207 = vsel %vm343, %v1206, %v1202
    %v1208 = vrot.slane %v1205, 7
    %v1209 = vsel %vm343, %v1208, %v1203
    %v1210 = vsel %vm259, %v1207, 0
    %v1211 = vsel %vm259, %v1209, 0
    %v1212 = vadd.s32 %v1210, %v1211
    %v1213 = vand.u32 %v1212, 65535
    %v1214 = vshrl.u32 %v1212, 16
    %v1215 = vcvt.s32.f32 %v1213
    %v1216 = vcvt.s32.f32 %v1214
    %1217 = vadd.xlane.f32.xlu0 %v1215
    %v1218 = vpop.xlane.xlu0 %1217
    %1219 = vadd.xlane.f32.xlu0 %v1216
    %v1220 = vpop.xlane.xlu0 %1219
    %v1221 = vcvt.f32.s32 %v1218
    %v1222 = vcvt.f32.s32 %v1220
    %v1223 = vshll.u32 %v1222, 16
    %v1224 = vadd.s32 %v1223, %v1221
    %vm1225 = vcmp.ge.s32.totalorder %v1224, %v277
    %v1226 = vsel %vm1225, %v1196, %v1190
    %v1227 = vsub.s32 %v1196, 1
    %v1228 = vsel %vm1225, %v1192, %v1227
    %v1229 = vsub.s32 %v1228, %v1226
    %v1230 = vadd.s32 %v1229, 1
    %v1231 = vshra.s32 %v1230, 1
    %v1232 = vadd.s32 %v1226, %v1231
    %v1233 = vrot.slane %v1232, 1
    %vm1234 = vcmp.ge.s32.totalorder %v321, %v1232
    %vm1235 = vcmp.ge.s32.totalorder %v325, %v1232
    %vm1236 = vcmp.ge.s32.totalorder %v329, %v1233
    %vm1237 = vcmp.ge.s32.totalorder %v333, %v1233
    %v1238 = vsel %vm1234, 1, 0
    %v1239 = vsel %vm1235, 1, 0
    %v1240 = vsel %vm1236, 1, 0
    %v1241 = vsel %vm1237, 1, 0
    %v1242 = vrot.slane %v1240, 7
    %v1243 = vsel %vm343, %v1242, %v1238
    %v1244 = vrot.slane %v1241, 7
    %v1245 = vsel %vm343, %v1244, %v1239
    %v1246 = vsel %vm259, %v1243, 0
    %v1247 = vsel %vm259, %v1245, 0
    %v1248 = vadd.s32 %v1246, %v1247
    %v1249 = vand.u32 %v1248, 65535
    %v1250 = vshrl.u32 %v1248, 16
    %v1251 = vcvt.s32.f32 %v1249
    %v1252 = vcvt.s32.f32 %v1250
    %1253 = vadd.xlane.f32.xlu0 %v1251
    %v1254 = vpop.xlane.xlu0 %1253
    %1255 = vadd.xlane.f32.xlu0 %v1252
    %v1256 = vpop.xlane.xlu0 %1255
    %v1257 = vcvt.f32.s32 %v1254
    %v1258 = vcvt.f32.s32 %v1256
    %v1259 = vshll.u32 %v1258, 16
    %v1260 = vadd.s32 %v1259, %v1257
    %vm1261 = vcmp.ge.s32.totalorder %v1260, %v277
    %v1262 = vsel %vm1261, %v1232, %v1226
    %v1263 = vsub.s32 %v1232, 1
    %v1264 = vsel %vm1261, %v1228, %v1263
    %v1265 = vsub.s32 %v1264, %v1262
    %v1266 = vadd.s32 %v1265, 1
    %v1267 = vshra.s32 %v1266, 1
    %v1268 = vadd.s32 %v1262, %v1267
    %v1269 = vrot.slane %v1268, 1
    %vm1270 = vcmp.ge.s32.totalorder %v321, %v1268
    %vm1271 = vcmp.ge.s32.totalorder %v325, %v1268
    %vm1272 = vcmp.ge.s32.totalorder %v329, %v1269
    %vm1273 = vcmp.ge.s32.totalorder %v333, %v1269
    %v1274 = vsel %vm1270, 1, 0
    %v1275 = vsel %vm1271, 1, 0
    %v1276 = vsel %vm1272, 1, 0
    %v1277 = vsel %vm1273, 1, 0
    %v1278 = vrot.slane %v1276, 7
    %v1279 = vsel %vm343, %v1278, %v1274
    %v1280 = vrot.slane %v1277, 7
    %v1281 = vsel %vm343, %v1280, %v1275
    %v1282 = vsel %vm259, %v1279, 0
    %v1283 = vsel %vm259, %v1281, 0
    %v1284 = vadd.s32 %v1282, %v1283
    %v1285 = vand.u32 %v1284, 65535
    %v1286 = vshrl.u32 %v1284, 16
    %v1287 = vcvt.s32.f32 %v1285
    %v1288 = vcvt.s32.f32 %v1286
    %1289 = vadd.xlane.f32.xlu0 %v1287
    %v1290 = vpop.xlane.xlu0 %1289
    %1291 = vadd.xlane.f32.xlu0 %v1288
    %v1292 = vpop.xlane.xlu0 %1291
    %v1293 = vcvt.f32.s32 %v1290
    %v1294 = vcvt.f32.s32 %v1292
    %v1295 = vshll.u32 %v1294, 16
    %v1296 = vadd.s32 %v1295, %v1293
    %vm1297 = vcmp.ge.s32.totalorder %v1296, %v277
    %v1298 = vsel %vm1297, %v1268, %v1262
    %v1299 = vsub.s32 %v1268, 1
    %v1300 = vsel %vm1297, %v1264, %v1299
    %v1301 = vsub.s32 %v1300, %v1298
    %v1302 = vadd.s32 %v1301, 1
    %v1303 = vshra.s32 %v1302, 1
    %v1304 = vadd.s32 %v1298, %v1303
    %v1305 = vrot.slane %v1304, 1
    %vm1306 = vcmp.ge.s32.totalorder %v321, %v1304
    %vm1307 = vcmp.ge.s32.totalorder %v325, %v1304
    %vm1308 = vcmp.ge.s32.totalorder %v329, %v1305
    %vm1309 = vcmp.ge.s32.totalorder %v333, %v1305
    %v1310 = vsel %vm1306, 1, 0
    %v1311 = vsel %vm1307, 1, 0
    %v1312 = vsel %vm1308, 1, 0
    %v1313 = vsel %vm1309, 1, 0
    %v1314 = vrot.slane %v1312, 7
    %v1315 = vsel %vm343, %v1314, %v1310
    %v1316 = vrot.slane %v1313, 7
    %v1317 = vsel %vm343, %v1316, %v1311
    %v1318 = vsel %vm259, %v1315, 0
    %v1319 = vsel %vm259, %v1317, 0
    %v1320 = vadd.s32 %v1318, %v1319
    %v1321 = vand.u32 %v1320, 65535
    %v1322 = vshrl.u32 %v1320, 16
    %v1323 = vcvt.s32.f32 %v1321
    %v1324 = vcvt.s32.f32 %v1322
    %1325 = vadd.xlane.f32.xlu0 %v1323
    %v1326 = vpop.xlane.xlu0 %1325
    %1327 = vadd.xlane.f32.xlu0 %v1324
    %v1328 = vpop.xlane.xlu0 %1327
    %v1329 = vcvt.f32.s32 %v1326
    %v1330 = vcvt.f32.s32 %v1328
    %v1331 = vshll.u32 %v1330, 16
    %v1332 = vadd.s32 %v1331, %v1329
    %vm1333 = vcmp.ge.s32.totalorder %v1332, %v277
    %v1334 = vsel %vm1333, %v1304, %v1298
    %v1335 = vsub.s32 %v1304, 1
    %v1336 = vsel %vm1333, %v1300, %v1335
    %v1337 = vsub.s32 %v1336, %v1334
    %v1338 = vadd.s32 %v1337, 1
    %v1339 = vshra.s32 %v1338, 1
    %v1340 = vadd.s32 %v1334, %v1339
    %v1341 = vrot.slane %v1340, 1
    %vm1342 = vcmp.ge.s32.totalorder %v321, %v1340
    %vm1343 = vcmp.ge.s32.totalorder %v325, %v1340
    %vm1344 = vcmp.ge.s32.totalorder %v329, %v1341
    %vm1345 = vcmp.ge.s32.totalorder %v333, %v1341
    %v1346 = vsel %vm1342, 1, 0
    %v1347 = vsel %vm1343, 1, 0
    %v1348 = vsel %vm1344, 1, 0
    %v1349 = vsel %vm1345, 1, 0
    %v1350 = vrot.slane %v1348, 7
    %v1351 = vsel %vm343, %v1350, %v1346
    %v1352 = vrot.slane %v1349, 7
    %v1353 = vsel %vm343, %v1352, %v1347
    %v1354 = vsel %vm259, %v1351, 0
    %v1355 = vsel %vm259, %v1353, 0
    %v1356 = vadd.s32 %v1354, %v1355
    %v1357 = vand.u32 %v1356, 65535
    %v1358 = vshrl.u32 %v1356, 16
    %v1359 = vcvt.s32.f32 %v1357
    %v1360 = vcvt.s32.f32 %v1358
    %1361 = vadd.xlane.f32.xlu0 %v1359
    %v1362 = vpop.xlane.xlu0 %1361
    %1363 = vadd.xlane.f32.xlu0 %v1360
    %v1364 = vpop.xlane.xlu0 %1363
    %v1365 = vcvt.f32.s32 %v1362
    %v1366 = vcvt.f32.s32 %v1364
    %v1367 = vshll.u32 %v1366, 16
    %v1368 = vadd.s32 %v1367, %v1365
    %vm1369 = vcmp.ge.s32.totalorder %v1368, %v277
    %v1370 = vsel %vm1369, %v1340, %v1334
    %v1371 = vsub.s32 %v1340, 1
    %v1372 = vsel %vm1369, %v1336, %v1371
    %v1373 = vsub.s32 %v1372, %v1370
    %v1374 = vadd.s32 %v1373, 1
    %v1375 = vshra.s32 %v1374, 1
    %v1376 = vadd.s32 %v1370, %v1375
    %v1377 = vrot.slane %v1376, 1
    %vm1378 = vcmp.ge.s32.totalorder %v321, %v1376
    %vm1379 = vcmp.ge.s32.totalorder %v325, %v1376
    %vm1380 = vcmp.ge.s32.totalorder %v329, %v1377
    %vm1381 = vcmp.ge.s32.totalorder %v333, %v1377
    %v1382 = vsel %vm1378, 1, 0
    %v1383 = vsel %vm1379, 1, 0
    %v1384 = vsel %vm1380, 1, 0
    %v1385 = vsel %vm1381, 1, 0
    %v1386 = vrot.slane %v1384, 7
    %v1387 = vsel %vm343, %v1386, %v1382
    %v1388 = vrot.slane %v1385, 7
    %v1389 = vsel %vm343, %v1388, %v1383
    %v1390 = vsel %vm259, %v1387, 0
    %v1391 = vsel %vm259, %v1389, 0
    %v1392 = vadd.s32 %v1390, %v1391
    %v1393 = vand.u32 %v1392, 65535
    %v1394 = vshrl.u32 %v1392, 16
    %v1395 = vcvt.s32.f32 %v1393
    %v1396 = vcvt.s32.f32 %v1394
    %1397 = vadd.xlane.f32.xlu0 %v1395
    %v1398 = vpop.xlane.xlu0 %1397
    %1399 = vadd.xlane.f32.xlu0 %v1396
    %v1400 = vpop.xlane.xlu0 %1399
    %v1401 = vcvt.f32.s32 %v1398
    %v1402 = vcvt.f32.s32 %v1400
    %v1403 = vshll.u32 %v1402, 16
    %v1404 = vadd.s32 %v1403, %v1401
    %vm1405 = vcmp.ge.s32.totalorder %v1404, %v277
    %v1406 = vsel %vm1405, %v1376, %v1370
    %v1407 = vsub.s32 %v1376, 1
    %v1408 = vsel %vm1405, %v1372, %v1407
    %v1409 = vsub.s32 %v1408, %v1406
    %v1410 = vadd.s32 %v1409, 1
    %v1411 = vshra.s32 %v1410, 1
    %v1412 = vadd.s32 %v1406, %v1411
    %v1413 = vrot.slane %v1412, 1
    %vm1414 = vcmp.ge.s32.totalorder %v321, %v1412
    %vm1415 = vcmp.ge.s32.totalorder %v325, %v1412
    %vm1416 = vcmp.ge.s32.totalorder %v329, %v1413
    %vm1417 = vcmp.ge.s32.totalorder %v333, %v1413
    %v1418 = vsel %vm1414, 1, 0
    %v1419 = vsel %vm1415, 1, 0
    %v1420 = vsel %vm1416, 1, 0
    %v1421 = vsel %vm1417, 1, 0
    %v1422 = vrot.slane %v1420, 7
    %v1423 = vsel %vm343, %v1422, %v1418
    %v1424 = vrot.slane %v1421, 7
    %v1425 = vsel %vm343, %v1424, %v1419
    %v1426 = vsel %vm259, %v1423, 0
    %v1427 = vsel %vm259, %v1425, 0
    %v1428 = vadd.s32 %v1426, %v1427
    %v1429 = vand.u32 %v1428, 65535
    %v1430 = vshrl.u32 %v1428, 16
    %v1431 = vcvt.s32.f32 %v1429
    %v1432 = vcvt.s32.f32 %v1430
    %1433 = vadd.xlane.f32.xlu0 %v1431
    %v1434 = vpop.xlane.xlu0 %1433
    %1435 = vadd.xlane.f32.xlu0 %v1432
    %v1436 = vpop.xlane.xlu0 %1435
    %v1437 = vcvt.f32.s32 %v1434
    %v1438 = vcvt.f32.s32 %v1436
    %v1439 = vshll.u32 %v1438, 16
    %v1440 = vadd.s32 %v1439, %v1437
    %vm1441 = vcmp.ge.s32.totalorder %v1440, %v277
    %v1442 = vsel %vm1441, %v1412, %v1406
    %v1443 = vsub.s32 %v1412, 1
    %v1444 = vsel %vm1441, %v1408, %v1443
    %v1445 = vsub.s32 %v1444, %v1442
    %v1446 = vadd.s32 %v1445, 1
    %v1447 = vshra.s32 %v1446, 1
    %v1448 = vadd.s32 %v1442, %v1447
    %v1449 = vrot.slane %v1448, 1
    %vm1450 = vcmp.ge.s32.totalorder %v321, %v1448
    %vm1451 = vcmp.ge.s32.totalorder %v325, %v1448
    %vm1452 = vcmp.ge.s32.totalorder %v329, %v1449
    %vm1453 = vcmp.ge.s32.totalorder %v333, %v1449
    %v1454 = vsel %vm1450, 1, 0
    %v1455 = vsel %vm1451, 1, 0
    %v1456 = vsel %vm1452, 1, 0
    %v1457 = vsel %vm1453, 1, 0
    %v1458 = vrot.slane %v1456, 7
    %v1459 = vsel %vm343, %v1458, %v1454
    %v1460 = vrot.slane %v1457, 7
    %v1461 = vsel %vm343, %v1460, %v1455
    %v1462 = vsel %vm259, %v1459, 0
    %v1463 = vsel %vm259, %v1461, 0
    %v1464 = vadd.s32 %v1462, %v1463
    %v1465 = vand.u32 %v1464, 65535
    %v1466 = vshrl.u32 %v1464, 16
    %v1467 = vcvt.s32.f32 %v1465
    %v1468 = vcvt.s32.f32 %v1466
    %1469 = vadd.xlane.f32.xlu0 %v1467
    %v1470 = vpop.xlane.xlu0 %1469
    %1471 = vadd.xlane.f32.xlu0 %v1468
    %v1472 = vpop.xlane.xlu0 %1471
    %v1473 = vcvt.f32.s32 %v1470
    %v1474 = vcvt.f32.s32 %v1472
    %v1475 = vshll.u32 %v1474, 16
    %v1476 = vadd.s32 %v1475, %v1473
    %vm1477 = vcmp.ge.s32.totalorder %v1476, %v277
    %v1478 = vsel %vm1477, %v1448, %v1442
    %v1479 = vrot.slane %v1478, 1
    %vm1480 = vcmp.ge.s32.totalorder %v321, %v1478
    %vm1481 = vcmp.ge.s32.totalorder %v325, %v1478
    %vm1482 = vcmp.ge.s32.totalorder %v329, %v1479
    %vm1483 = vcmp.ge.s32.totalorder %v333, %v1479
    %vm1484 = vcmp.gt.s32.totalorder %v277, 0
    %v1485 = vsel %vm1484, 1, 0
    %vm1486 = vcmp.eq.s32.totalorder %v1485, 1
    %v1487 = vsel %vm1486, 1, 0
    %v1488 = vrot.slane %v1487, 1
    %vm1489 = vcmp.ne.s32.totalorder %v1487, 0
    %vm1490 = vcmp.ne.s32.totalorder %v1488, 0
    %vm1491 = vmand %vm1480, %vm1489
    %vm1492 = vmand %vm1481, %vm1489
    %vm1493 = vmand %vm1482, %vm1490
    %vm1494 = vmand %vm1483, %vm1490
    %v1495 = vsel %vm1491, 1, 0
    %v1496 = vsel %vm1492, 1, 0
    %v1497 = vsel %vm1493, 1, 0
    %v1498 = vsel %vm1494, 1, 0
    %v1499 = vcombine.low %v1495, %v1496
    %v1501 = vunpack.c.l.s4 1966171168
    %v1502 = vunpack.c.0.s8 %v1501
    %v1503 = vlaneseq
    %v1504 = vshrl.u32 %v1503, 7
    %v1505 = vsub.s32 %v1502, %v1504
    %v1506 = vrot.slane %v1499, %v1505
    %v1508 = vunpack.c.l.s4 1966171168
    %v1509 = vunpack.c.0.s8 %v1508
    %v1510 = vlaneseq
    %v1511 = vshrl.u32 %v1510, 7
    %v1512 = vsub.s32 %v1509, %v1511
    %v1513 = vrot.slane %v1506, %v1512
    %v1514 = vcombine.low %v1497, %v1498
    %v1516 = vunpack.c.l.s4 1966171168
    %v1517 = vunpack.c.0.s8 %v1516
    %v1518 = vlaneseq
    %v1519 = vshrl.u32 %v1518, 7
    %v1520 = vsub.s32 %v1517, %v1519
    %v1521 = vrot.slane %v1514, %v1520
    %v1523 = vunpack.c.l.s4 1966171168
    %v1524 = vunpack.c.0.s8 %v1523
    %v1525 = vlaneseq
    %v1526 = vshrl.u32 %v1525, 7
    %v1527 = vsub.s32 %v1524, %v1526
    %v1528 = vrot.slane %v1521, %v1527
    %vm1529 = vcmp.ne.s32.totalorder %v1513, 0
    %vm1530 = vcmp.ne.s32.totalorder %v1528, 0
    %vm1531 = vmor %vm230, %vm1529
    %vm1532 = vmor %vm231, %vm1530
    %v1533 = vsel %vm1531, 1, 0
    %v1534 = vsel %vm1532, 1, 0
    %v1535 = vcvt.s32.f32 %v1533
    %v1536 = vcvt.s32.f32 %v1534
    %v1539 = vlaneseq
    %v1540 = vshrl.u32 %v1539, 7
    %v1541 = vsub.s32 0, %v1540
    %v1542 = vrot.slane %v1535, %v1541
    %v1543 = vlaneseq
    %v1544 = vshrl.u32 %v1543, 7
    %v1545 = vsub.s32 1, %v1544
    %v1546 = vrot.slane %v1535, %v1545
    %v1547 = vlaneseq
    %v1548 = vshrl.u32 %v1547, 7
    %v1549 = vsub.s32 0, %v1548
    %v1550 = vrot.slane %v1536, %v1549
    %v1551 = vlaneseq
    %v1552 = vshrl.u32 %v1551, 7
    %v1553 = vsub.s32 1, %v1552
    %v1554 = vrot.slane %v1536, %v1553
    %v1559 = vmul.f32 %v226, %v1542
    %v1560 = vmul.f32 %v227, %v1546
    %v1561 = vmul.f32 %v228, %v1550
    %v1562 = vmul.f32 %v229, %v1554
    %v1567 = vrot.slane %v1561, 7
    %v1568 = vsel %vm343, %v1567, %v1559
    %v1569 = vrot.slane %v1562, 7
    %v1570 = vsel %vm343, %v1569, %v1560
    %v1573 = vsel %vm259, %v1568, 0.0
    %v1574 = vsel %vm259, %v1570, 0.0
    %v1575 = vadd.f32 %v1573, %v1574
    %1576 = vadd.xlane.f32.xlu0 %v1575
    %v1577 = vpop.xlane.xlu0 %1576
    %v1578 = vld [vmem:[#allocation7] sm:$0xff]
    %v1579 = vld [vmem:[#allocation7 + $0x8] sm:$0xff]
    %v1580 = vld [vmem:[#allocation7 + $0x10] sm:$0xff]
    %v1581 = vld [vmem:[#allocation7 + $0x18] sm:$0xff]
    %v1582 = vld [vmem:[#allocation8] sm:$0xff]
    %v1583 = vld [vmem:[#allocation8 + $0x8] sm:$0xff]
    %v1584 = vld [vmem:[#allocation8 + $0x10] sm:$0xff]
    %v1585 = vld [vmem:[#allocation8 + $0x18] sm:$0xff]
    %v1586 = vsub.f32 %v1578, %v1582
    %v1587 = vsub.f32 %v1579, %v1583
    %v1588 = vsub.f32 %v1580, %v1584
    %v1589 = vsub.f32 %v1581, %v1585
    %v1590 = vand.u32 2147483647, %v1586
    %v1591 = vand.u32 2147483647, %v1587
    %v1592 = vand.u32 2147483647, %v1588
    %v1593 = vand.u32 2147483647, %v1589
    %vm1594 = vcmp.lt.f32.partialorder %v1590, 1.0
    %vm1595 = vcmp.lt.f32.partialorder %v1591, 1.0
    %vm1596 = vcmp.lt.f32.partialorder %v1592, 1.0
    %vm1597 = vcmp.lt.f32.partialorder %v1593, 1.0
    %v1598 = vmul.f32 %v1586, 0.5
    %v1599 = vmul.f32 %v1587, 0.5
    %v1600 = vmul.f32 %v1588, 0.5
    %v1601 = vmul.f32 %v1589, 0.5
    %v1602 = vmul.f32 %v1598, %v1586
    %v1603 = vmul.f32 %v1599, %v1587
    %v1604 = vmul.f32 %v1600, %v1588
    %v1605 = vmul.f32 %v1601, %v1589
    %v1606 = vsub.f32 %v1590, 0.5
    %v1607 = vsub.f32 %v1591, 0.5
    %v1608 = vsub.f32 %v1592, 0.5
    %v1609 = vsub.f32 %v1593, 0.5
    %v1610 = vsel %vm1594, %v1602, %v1606
    %v1611 = vsel %vm1595, %v1603, %v1607
    %v1612 = vsel %vm1596, %v1604, %v1608
    %v1613 = vsel %vm1597, %v1605, %v1609
    %v1616 = vlaneseq
    %v1617 = vshrl.u32 %v1616, 7
    %v1618 = vsub.s32 0, %v1617
    %v1619 = vrot.slane %v234, %v1618
    %v1620 = vlaneseq
    %v1621 = vshrl.u32 %v1620, 7
    %v1622 = vsub.s32 1, %v1621
    %v1623 = vrot.slane %v234, %v1622
    %v1624 = vlaneseq
    %v1625 = vshrl.u32 %v1624, 7
    %v1626 = vsub.s32 0, %v1625
    %v1627 = vrot.slane %v235, %v1626
    %v1628 = vlaneseq
    %v1629 = vshrl.u32 %v1628, 7
    %v1630 = vsub.s32 1, %v1629
    %v1631 = vrot.slane %v235, %v1630
    %v1636 = vmul.f32 %v1610, %v1619
    %v1637 = vmul.f32 %v1611, %v1623
    %v1638 = vmul.f32 %v1612, %v1627
    %v1639 = vmul.f32 %v1613, %v1631
    %v1640 = vadd.f32 %v1636, %v1637
    %1641 = vadd.xlane.f32.xlu0 %v1640
    %v1642 = vpop.xlane.xlu0 %1641
    %v1643 = vadd.f32 %v1638, %v1639
    %1644 = vadd.xlane.f32.xlu0 %v1643
    %v1645 = vpop.xlane.xlu0 %1644
    %v1648 = vlaneseq
    %v1649 = vand.u32 %v1648, 127
    %v1650 = vlaneseq
    %v1651 = vshrl.u32 %v1650, 7
    %v1652 = vsub.s32 %v1649, %v1651
    %v1653 = vrot.slane %v1642, %v1652
    %v1654 = vlaneseq
    %v1655 = vshrl.u32 %v1654, 7
    %v1656 = vsub.s32 %v1649, %v1655
    %v1657 = vrot.slane %v1645, %v1656
    %v1658 = vsel %vm343, %v1657, %v1653
    %vm1660 = vcmask 58368
    %v1661 = vsel %vm1660, %v1658, 0.0
    %1662 = vadd.xlane.f32.xlu0 %v1661
    %v1663 = vpop.xlane.xlu0 %1662
    %vm1664 = vcmp.eq.s32.totalorder %v1649, 0
    %v1666 = vlaneseq
    %v1667 = vshrl.u32 %v1666, 7
    %v1668 = vsub.s32 0, %v1667
    %v1669 = vrot.slane %v1577, %v1668
    %v1670 = vlaneseq
    %v1671 = vshrl.u32 %v1670, 7
    %v1672 = vsub.s32 1, %v1671
    %v1673 = vrot.slane %v1577, %v1672
    %v1676 = vsel %vm1664, 1, 0
    %vm1677 = vcmp.eq.s32.totalorder %v1676, 1
    %v1678 = vsel %vm1677, %v1669, 0.0
    %v1679 = vsel %vm1677, %v1673, 0.0
    %vm1680 = vcmp.eq.s32.totalorder %v1649, 1
    %v1682 = vlaneseq
    %v1683 = vshrl.u32 %v1682, 7
    %v1684 = vsub.s32 0, %v1683
    %v1685 = vrot.slane %v1663, %v1684
    %v1686 = vlaneseq
    %v1687 = vshrl.u32 %v1686, 7
    %v1688 = vsub.s32 1, %v1687
    %v1689 = vrot.slane %v1663, %v1688
    %v1692 = vsel %vm1680, 1, 0
    %vm1693 = vcmp.eq.s32.totalorder %v1692, 1
    %v1694 = vsel %vm1693, %v1685, 0.0
    %v1695 = vsel %vm1693, %v1689, 0.0
    %v1696 = vadd.f32 %v1678, %v1694
    %v1697 = vadd.f32 %v1679, %v1695
    %vm1698 = vcmp.eq.s32.totalorder %v1649, 2
    %v1699 = vcvt.s32.f32 %v274
    %v1701 = vlaneseq
    %v1702 = vshrl.u32 %v1701, 7
    %v1703 = vsub.s32 0, %v1702
    %v1704 = vrot.slane %v1699, %v1703
    %v1705 = vlaneseq
    %v1706 = vshrl.u32 %v1705, 7
    %v1707 = vsub.s32 1, %v1706
    %v1708 = vrot.slane %v1699, %v1707
    %v1711 = vsel %vm1698, 1, 0
    %vm1712 = vcmp.eq.s32.totalorder %v1711, 1
    %v1713 = vsel %vm1712, %v1704, 0.0
    %v1714 = vsel %vm1712, %v1708, 0.0
    %v1715 = vadd.f32 %v1696, %v1713
    %v1716 = vadd.f32 %v1697, %v1714
    %1717 = vst [vmem:[#allocation10] sm:$0x1] %v1715
    %1718 = vst [vmem:[#allocation10 + $0x1] sm:$0x1] %v1716
    // Predicated region
    $region34: #{tpu_custom_call.1} parent=1 // pred_check
      _
    $region35: #{tpu_custom_call.1} parent=1 // pred_check_branch
      %1720 = sbr.rel (0) target = $region37
    $region36: #{tpu_custom_call.1} parent=1 // pred_region
      %s1722 = ssub.s32 32, 32
      %1723 = vsyncadd [#allocation4], %s1722
      %s1724 = sshll.u32 [#allocation10], 4
      %s1725 = int_to_ptr.vmem [resolvable:$true] %s1724
      %1730 = dma.vmem_to_hbm [thread:$0]  %s1725, 32, %s4, [#allocation4], 16, 16, 1
    $region37: #{tpu_custom_call.1} parent=1 // pred_fallthru
      _
    // Predicated region
    $region38: #{tpu_custom_call.1} parent=1 // pred_check
      _
    $region39: #{tpu_custom_call.1} parent=1 // pred_check_branch
      %1732 = sbr.rel (0) target = $region41
    $region40: #{tpu_custom_call.1} parent=1 // pred_region
      %1733 = dma.done [#allocation4], 32
    $region41: #{tpu_custom_call.1} parent=1 // pred_fallthru
      _
    %1734 = vsyncpa [#allocation3], 1
    %1735 = vsyncpa [#allocation6], 1
    %1736 = vsyncpa [#allocation9], 1
    %1737 = vsyncpa [#allocation4], 1

</llo_original>
